<compile_context>
chip_gen: v7x
topology: tpu7x:2x2x1
jax: 0.10.0
libtpu: 0.0.40
codegen_flags: <defaults>
</compile_context>

<pallas_src>
import functools

import jax
import jax.numpy as jnp
import numpy as np
from jax.experimental import pallas as pl
from jax.experimental.pallas import tpu as pltpu


# ----------------------------------------------------------------------------
# Fully fused CSPStem kernel (all ResConvBlocks, one batch element / grid step)
# ----------------------------------------------------------------------------
def _cspstem_kernel(H, K, proj_flags, x_ref, *refs):
    # refs = per-block weights (w1b, b1b, w2b, b2b[, wrb, brb]) ..., o_ref, ypad
    ypad_ref = refs[-1]
    o_ref = refs[-2]
    wrefs = refs[:-2]

    p = (K - 1) // 2
    x2 = x_ref[0]                                        # (H, W*Cin) lane-dense

    # Vertical SAME-halo zero rows are invariant across blocks: write them once.
    if p > 0:
        zrow = jnp.zeros((p, ypad_ref.shape[1]), jnp.float32)
        ypad_ref[pl.ds(0, p), :] = zrow
        ypad_ref[pl.ds(H + p, p), :] = zrow

    idx = 0
    for has_proj in proj_flags:
        w1_ref, b1_ref, w2_ref, b2_ref = wrefs[idx:idx + 4]
        idx += 4
        if has_proj:
            wr_ref, br_ref = wrefs[idx:idx + 2]
            idx += 2

        # conv1 (1x1) + BN + SiLU — block-diagonal matmul, stays in VMEM/vregs.
        y = jnp.dot(x2, w1_ref[...], preferred_element_type=jnp.float32) + b1_ref[...]
        y = y * jax.nn.sigmoid(y)
        ypad_ref[pl.ds(p, H), :] = y                     # vertical halo scratch

        # Residual link (+ conv2 bias) seeds the accumulator.
        if has_proj:
            acc = (jnp.dot(x2, wr_ref[...], preferred_element_type=jnp.float32)
                   + br_ref[...] + b2_ref[...])
        else:
            acc = x2 + b2_ref[...]                       # identity residual: free

        # conv2 (KxK, stride 1, SAME): K lane-dense banded matmuls.
        for dy in range(K):                              # static unroll, K MXU pushes
            acc = acc + jnp.dot(ypad_ref[pl.ds(dy, H), :], w2_ref[dy],
                                preferred_element_type=jnp.float32)

        x2 = acc * jax.nn.sigmoid(acc)                   # SiLU -> next block input

    o_ref[0] = x2.astype(o_ref.dtype)                    # lane-dense (H, W*Cout) store


def cspstem_pallas(x_f, blocks, H, W, K):
    """Whole CSPStem as a single pallas_call over the batch."""
    N = x_f.shape[0]
    WCin = x_f.shape[2]
    WCb = blocks[0]["b1b"].shape[1]
    WCout = blocks[-1]["b2b"].shape[1]
    p = (K - 1) // 2
    proj_flags = tuple(blk["wrb"] is not None for blk in blocks)

    in_specs = [pl.BlockSpec((1, H, WCin), lambda n: (n, 0, 0))]   # activation tile
    args = [x_f]
    for blk in blocks:
        wci = blk["w1b"].shape[0]
        wcb = blk["b1b"].shape[1]
        wco = blk["b2b"].shape[1]
        in_specs += [
            pl.BlockSpec((wci, wcb), lambda n: (0, 0)),            # conv1 block-diag
            pl.BlockSpec((1, wcb), lambda n: (0, 0)),
            pl.BlockSpec((K, wcb, wco), lambda n: (0, 0, 0)),      # conv2 banded
            pl.BlockSpec((1, wco), lambda n: (0, 0)),
        ]
        args += [blk["w1b"], blk["b1b"], blk["w2b"], blk["b2b"]]
        if blk["wrb"] is not None:                                 # residual_proj
            in_specs += [pl.BlockSpec((wci, wco), lambda n: (0, 0)),
                         pl.BlockSpec((1, wco), lambda n: (0, 0))]
            args += [blk["wrb"], blk["brb"]]

    return pl.pallas_call(
        functools.partial(_cspstem_kernel, H, K, proj_flags),
        out_shape=jax.ShapeDtypeStruct((N, H, WCout), jnp.float32),
        grid=(N,),
        in_specs=in_specs,
        out_specs=pl.BlockSpec((1, H, WCout), lambda n: (n, 0, 0)),
        scratch_shapes=[pltpu.VMEM((H + 2 * p, WCb), jnp.float32)],  # vertical halo
        compiler_params=pltpu.CompilerParams(
            dimension_semantics=("parallel",),        # lets v7x split batch over 2 TCs
            vmem_limit_bytes=32 * 1024 * 1024,
        ),
    )(*args)


# ----------------------------------------------------------------------------
# Parameter construction (deterministic, BN fused into conv) + weight expansion
# ----------------------------------------------------------------------------
def make_convbn(key, cin, cout, k):
    """Conv (no bias) + eval-mode BatchNorm, fused to (weight HWIO, bias)."""
    kw, km, kv, kg, kb = jax.random.split(key, 5)
    w = jax.random.normal(kw, (k, k, cin, cout), jnp.float32) * 0.1
    mean = jax.random.normal(km, (cout,), jnp.float32) * 0.1
    var = jax.random.uniform(kv, (cout,), jnp.float32, minval=0.5, maxval=1.5)
    gamma = jax.random.uniform(kg, (cout,), jnp.float32, minval=0.8, maxval=1.2)
    beta = jax.random.normal(kb, (cout,), jnp.float32) * 0.1
    eps = 1e-5
    scale = gamma / jnp.sqrt(var + eps)
    return w * scale, beta - mean * scale


def expand_pointwise(w_hwio, W):
    """1x1 conv weight (1,1,Cin,Cout) -> block-diagonal (W*Cin, W*Cout)."""
    return jnp.kron(jnp.eye(W, dtype=jnp.float32), w_hwio[0, 0])


def expand_banded(w_hwio, W, pad):
    """KxK conv weight (K,K,Cb,Cout) -> (K, W*Cb, W*Cout) banded matrices.

    Row offset dy is handled by slicing the vertically padded activation in the
    kernel; column offsets dx (incl. horizontal SAME-padding) are encoded as
    shifted block-diagonals here.
    """
    K = w_hwio.shape[0]
    mats = []
    for dy in range(K):
        B = sum(jnp.kron(jnp.eye(W, k=pad - dx, dtype=jnp.float32), w_hwio[dy, dx])
                for dx in range(K))
        mats.append(B)
    return jnp.stack(mats, axis=0)


def build_cspstem_params(key, in_c, out_c, btn_c, stride, ksize, num_blocks, W):
    assert stride == 1, "test config uses stride=1 (CSP branch, no downsample)"
    out_half = out_c // 2
    pad = (ksize - 1) // 2
    blocks = []
    for block_id in range(num_blocks):
        bin_c = in_c // 2 if (stride == 1 and block_id == 0) else out_half
        key, k1, k2, kr = jax.random.split(key, 4)
        w1, b1 = make_convbn(k1, bin_c, btn_c, 1)                 # conv1: 1x1 (k1kx)
        w2, b2 = make_convbn(k2, btn_c, out_half, ksize)          # conv2: KxK
        blk = dict(
            w1_full=w1, b1=b1, w2_full=w2, b2=b2,
            w1b=expand_pointwise(w1, W), b1b=jnp.tile(b1, W)[None, :],
            w2b=expand_banded(w2, W, pad), b2b=jnp.tile(b2, W)[None, :],
        )
        if bin_c != out_half:                                     # residual_proj
            wr, br = make_convbn(kr, bin_c, out_half, 1)
            blk.update(wr_full=wr, br=br,
                       wrb=expand_pointwise(wr, W),
                       brb=jnp.tile(br, W)[None, :])
        else:
            blk.update(wr_full=None, br=None, wrb=None, brb=None)
        blocks.append(blk)
    return blocks


# ----------------------------------------------------------------------------
# Forward passes
# ----------------------------------------------------------------------------
def cspstem_forward(x_nchw, blocks, H, W, K):
    N, C = x_nchw.shape[0], x_nchw.shape[1]
    # NCHW -> lane-dense (N, H, W*C): channels contiguous per pixel, W*C on lanes.
    x = jnp.transpose(x_nchw, (0, 2, 3, 1)).reshape(N, H, W * C)
    x = cspstem_pallas(x, blocks, H, W, K)
    Cout = x.shape[2] // W
    return jnp.transpose(x.reshape(N, H, W, Cout), (0, 3, 1, 2))   # -> NCHW


def cspstem_reference(x_nchw, blocks):
    """Pure-JAX reference (lax.conv) for correctness checking."""
    dn = ("NHWC", "HWIO", "NHWC")
    x = jnp.transpose(x_nchw, (0, 2, 3, 1))
    for blk in blocks:
        if blk["wr_full"] is not None:
            res = jax.lax.conv_general_dilated(
                x, blk["wr_full"], (1, 1), "SAME", dimension_numbers=dn) + blk["br"]
        else:
            res = x
        y = jax.lax.conv_general_dilated(
            x, blk["w1_full"], (1, 1), "SAME", dimension_numbers=dn) + blk["b1"]
        y = y * jax.nn.sigmoid(y)
        y = jax.lax.conv_general_dilated(
            y, blk["w2_full"], (1, 1), "SAME", dimension_numbers=dn) + blk["b2"]
        y = y + res
        x = y * jax.nn.sigmoid(y)
    return jnp.transpose(x, (0, 3, 1, 2))


# ----------------------------------------------------------------------------
if __name__ == "__main__":
    # CSPStem(in_c=8, out_c=16, btn_c=8, stride=1, kernel_size=3, num_blocks=2)
    # -> block0 takes in_c//2 = 4 channels (the CSP half) and has residual_proj;
    #    block1 has an identity residual.
    in_c, out_c, btn_c, stride, ksize, num_blocks = 8, 16, 8, 1, 3, 2
    N, H, W = 2, 16, 16

    key = jax.random.PRNGKey(0)
    kx, kp = jax.random.split(key)
    x = jax.random.normal(kx, (N, in_c // 2, H, W), jnp.float32)   # NCHW input

    blocks = build_cspstem_params(kp, in_c, out_c, btn_c, stride, ksize, num_blocks, W)

    out = jax.block_until_ready(cspstem_forward(x, blocks, H, W, ksize))
    ref = jax.block_until_ready(cspstem_reference(x, blocks))

    np.testing.assert_allclose(np.asarray(out), np.asarray(ref), rtol=1e-4, atol=1e-4)
    assert out.shape == (N, out_c // 2, H, W)

    print("KERNEL_OK")
</pallas_src>

<mosaic_0001>
module attributes {stable_mosaic.version = 11 : i64} {
  func.func @_cspstem_kernel(%arg0: i32, %arg1: memref<1x16x64xf32, #tpu.memory_space<vmem>>, %arg2: memref<64x128xf32, #tpu.memory_space<vmem>>, %arg3: memref<1x128xf32, #tpu.memory_space<vmem>>, %arg4: memref<3x128x128xf32, #tpu.memory_space<vmem>>, %arg5: memref<1x128xf32, #tpu.memory_space<vmem>>, %arg6: memref<64x128xf32, #tpu.memory_space<vmem>>, %arg7: memref<1x128xf32, #tpu.memory_space<vmem>>, %arg8: memref<128x128xf32, #tpu.memory_space<vmem>>, %arg9: memref<1x128xf32, #tpu.memory_space<vmem>>, %arg10: memref<3x128x128xf32, #tpu.memory_space<vmem>>, %arg11: memref<1x128xf32, #tpu.memory_space<vmem>>, %arg12: memref<1x16x128xf32, #tpu.memory_space<vmem>>, %arg13: memref<18x128xf32, #tpu.memory_space<vmem>>) attributes {dimension_semantics = [#tpu.dimension_semantics<parallel>], iteration_bounds = array<i64: 2>, scalar_prefetch = 0 : i64, scratch_operands = 1 : i64, tpu.core_type = #tpu.core_type<tc>, window_params = [{transform_indices = @transform_0, window_bounds = array<i64: 1, 16, 64>}, {pipeline_mode = #tpu.pipeline_mode<synchronous>, transform_indices = @transform_1, window_bounds = array<i64: 64, 128>}, {pipeline_mode = #tpu.pipeline_mode<synchronous>, transform_indices = @transform_2, window_bounds = array<i64: 1, 128>}, {pipeline_mode = #tpu.pipeline_mode<synchronous>, transform_indices = @transform_3, window_bounds = array<i64: 3, 128, 128>}, {pipeline_mode = #tpu.pipeline_mode<synchronous>, transform_indices = @transform_4, window_bounds = array<i64: 1, 128>}, {pipeline_mode = #tpu.pipeline_mode<synchronous>, transform_indices = @transform_5, window_bounds = array<i64: 64, 128>}, {pipeline_mode = #tpu.pipeline_mode<synchronous>, transform_indices = @transform_6, window_bounds = array<i64: 1, 128>}, {pipeline_mode = #tpu.pipeline_mode<synchronous>, transform_indices = @transform_7, window_bounds = array<i64: 128, 128>}, {pipeline_mode = #tpu.pipeline_mode<synchronous>, transform_indices = @transform_8, window_bounds = array<i64: 1, 128>}, {pipeline_mode = #tpu.pipeline_mode<synchronous>, transform_indices = @transform_9, window_bounds = array<i64: 3, 128, 128>}, {pipeline_mode = #tpu.pipeline_mode<synchronous>, transform_indices = @transform_10, window_bounds = array<i64: 1, 128>}, {transform_indices = @transform_11, window_bounds = array<i64: 1, 16, 128>}]} {
    %c0 = arith.constant 0 : index
    %c0_0 = arith.constant 0 : index
    %c0_1 = arith.constant 0 : index
    %0 = vector.load %arg1[%c0, %c0_0, %c0_1] : memref<1x16x64xf32, #tpu.memory_space<vmem>>, vector<1x16x64xf32>
    %1 = vector.shape_cast %0 : vector<1x16x64xf32> to vector<16x64xf32>
    %cst = arith.constant 0.000000e+00 : f32
    %2 = vector.broadcast %cst : f32 to vector<1x128xf32>
    %c0_2 = arith.constant 0 : index
    %c0_3 = arith.constant 0 : index
    %3 = vector.load %arg13[%c0_2, %c0_3] : memref<18x128xf32, #tpu.memory_space<vmem>>, vector<1x128xf32>
    tpu.vector_store %arg13[%c0_2, %c0_3], %2 {strides = array<i32>} : memref<18x128xf32, #tpu.memory_space<vmem>>, vector<1x128xf32>,
    %c17 = arith.constant 17 : index
    %c0_4 = arith.constant 0 : index
    %4 = vector.load %arg13[%c17, %c0_4] : memref<18x128xf32, #tpu.memory_space<vmem>>, vector<1x128xf32>
    tpu.vector_store %arg13[%c17, %c0_4], %2 {strides = array<i32>} : memref<18x128xf32, #tpu.memory_space<vmem>>, vector<1x128xf32>,
    %c0_5 = arith.constant 0 : index
    %c0_6 = arith.constant 0 : index
    %5 = vector.load %arg2[%c0_5, %c0_6] : memref<64x128xf32, #tpu.memory_space<vmem>>, vector<64x128xf32>
    %cst_7 = arith.constant dense<0.000000e+00> : vector<16x128xf32>
    %6 = tpu.matmul %1, %5, %cst_7 {dimension_numbers = #tpu.dot_dimension_numbers<[1], [0], [0], [1], [0, 0, 1, 1], [], []>} : vector<16x64xf32>, vector<64x128xf32>, vector<16x128xf32> -> vector<16x128xf32>
    %c0_8 = arith.constant 0 : index
    %c0_9 = arith.constant 0 : index
    %7 = vector.load %arg3[%c0_8, %c0_9] : memref<1x128xf32, #tpu.memory_space<vmem>>, vector<1x128xf32>
    %8 = vector.broadcast %7 : vector<1x128xf32> to vector<16x128xf32>
    %9 = arith.addf %6, %8 : vector<16x128xf32>
    %10 = arith.negf %9 : vector<16x128xf32>
    %11 = math.exp %10 : vector<16x128xf32>
    %cst_10 = arith.constant 1.000000e+00 : f32
    %12 = vector.broadcast %cst_10 : f32 to vector<16x128xf32>
    %13 = arith.addf %12, %11 : vector<16x128xf32>
    %14 = arith.divf %12, %13 : vector<16x128xf32>
    %15 = arith.mulf %9, %14 : vector<16x128xf32>
    %c1 = arith.constant 1 : index
    %c0_11 = arith.constant 0 : index
    %16 = vector.load %arg13[%c1, %c0_11] : memref<18x128xf32, #tpu.memory_space<vmem>>, vector<16x128xf32>
    tpu.vector_store %arg13[%c1, %c0_11], %15 {strides = array<i32>} : memref<18x128xf32, #tpu.memory_space<vmem>>, vector<16x128xf32>,
    %c0_12 = arith.constant 0 : index
    %c0_13 = arith.constant 0 : index
    %17 = vector.load %arg6[%c0_12, %c0_13] : memref<64x128xf32, #tpu.memory_space<vmem>>, vector<64x128xf32>
    %cst_14 = arith.constant dense<0.000000e+00> : vector<16x128xf32>
    %18 = tpu.matmul %1, %17, %cst_14 {dimension_numbers = #tpu.dot_dimension_numbers<[1], [0], [0], [1], [0, 0, 1, 1], [], []>} : vector<16x64xf32>, vector<64x128xf32>, vector<16x128xf32> -> vector<16x128xf32>
    %c0_15 = arith.constant 0 : index
    %c0_16 = arith.constant 0 : index
    %19 = vector.load %arg7[%c0_15, %c0_16] : memref<1x128xf32, #tpu.memory_space<vmem>>, vector<1x128xf32>
    %20 = vector.broadcast %19 : vector<1x128xf32> to vector<16x128xf32>
    %21 = arith.addf %18, %20 : vector<16x128xf32>
    %c0_17 = arith.constant 0 : index
    %c0_18 = arith.constant 0 : index
    %22 = vector.load %arg5[%c0_17, %c0_18] : memref<1x128xf32, #tpu.memory_space<vmem>>, vector<1x128xf32>
    %23 = vector.broadcast %22 : vector<1x128xf32> to vector<16x128xf32>
    %24 = arith.addf %21, %23 : vector<16x128xf32>
    %c0_19 = arith.constant 0 : index
    %c0_20 = arith.constant 0 : index
    %25 = vector.load %arg13[%c0_19, %c0_20] : memref<18x128xf32, #tpu.memory_space<vmem>>, vector<16x128xf32>
    %c0_21 = arith.constant 0 : index
    %c0_22 = arith.constant 0 : index
    %c0_23 = arith.constant 0 : index
    %26 = vector.load %arg4[%c0_21, %c0_22, %c0_23] : memref<3x128x128xf32, #tpu.memory_space<vmem>>, vector<1x128x128xf32>
    %27 = vector.shape_cast %26 : vector<1x128x128xf32> to vector<128x128xf32>
    %cst_24 = arith.constant dense<0.000000e+00> : vector<16x128xf32>
    %28 = tpu.matmul %25, %27, %cst_24 {dimension_numbers = #tpu.dot_dimension_numbers<[1], [0], [0], [1], [0, 0, 1, 1], [], []>} : vector<16x128xf32>, vector<128x128xf32>, vector<16x128xf32> -> vector<16x128xf32>
    %29 = arith.addf %24, %28 : vector<16x128xf32>
    %c1_25 = arith.constant 1 : index
    %c0_26 = arith.constant 0 : index
    %30 = vector.load %arg13[%c1_25, %c0_26] : memref<18x128xf32, #tpu.memory_space<vmem>>, vector<16x128xf32>
    %c1_27 = arith.constant 1 : index
    %c0_28 = arith.constant 0 : index
    %c0_29 = arith.constant 0 : index
    %31 = vector.load %arg4[%c1_27, %c0_28, %c0_29] : memref<3x128x128xf32, #tpu.memory_space<vmem>>, vector<1x128x128xf32>
    %32 = vector.shape_cast %31 : vector<1x128x128xf32> to vector<128x128xf32>
    %cst_30 = arith.constant dense<0.000000e+00> : vector<16x128xf32>
    %33 = tpu.matmul %30, %32, %cst_30 {dimension_numbers = #tpu.dot_dimension_numbers<[1], [0], [0], [1], [0, 0, 1, 1], [], []>} : vector<16x128xf32>, vector<128x128xf32>, vector<16x128xf32> -> vector<16x128xf32>
    %34 = arith.addf %29, %33 : vector<16x128xf32>
    %c2 = arith.constant 2 : index
    %c0_31 = arith.constant 0 : index
    %35 = vector.load %arg13[%c2, %c0_31] : memref<18x128xf32, #tpu.memory_space<vmem>>, vector<16x128xf32>
    %c2_32 = arith.constant 2 : index
    %c0_33 = arith.constant 0 : index
    %c0_34 = arith.constant 0 : index
    %36 = vector.load %arg4[%c2_32, %c0_33, %c0_34] : memref<3x128x128xf32, #tpu.memory_space<vmem>>, vector<1x128x128xf32>
    %37 = vector.shape_cast %36 : vector<1x128x128xf32> to vector<128x128xf32>
    %cst_35 = arith.constant dense<0.000000e+00> : vector<16x128xf32>
    %38 = tpu.matmul %35, %37, %cst_35 {dimension_numbers = #tpu.dot_dimension_numbers<[1], [0], [0], [1], [0, 0, 1, 1], [], []>} : vector<16x128xf32>, vector<128x128xf32>, vector<16x128xf32> -> vector<16x128xf32>
    %39 = arith.addf %34, %38 : vector<16x128xf32>
    %40 = arith.negf %39 : vector<16x128xf32>
    %41 = math.exp %40 : vector<16x128xf32>
    %cst_36 = arith.constant 1.000000e+00 : f32
    %42 = vector.broadcast %cst_36 : f32 to vector<16x128xf32>
    %43 = arith.addf %42, %41 : vector<16x128xf32>
    %44 = arith.divf %42, %43 : vector<16x128xf32>
    %45 = arith.mulf %39, %44 : vector<16x128xf32>
    %c0_37 = arith.constant 0 : index
    %c0_38 = arith.constant 0 : index
    %46 = vector.load %arg8[%c0_37, %c0_38] : memref<128x128xf32, #tpu.memory_space<vmem>>, vector<128x128xf32>
    %cst_39 = arith.constant dense<0.000000e+00> : vector<16x128xf32>
    %47 = tpu.matmul %45, %46, %cst_39 {dimension_numbers = #tpu.dot_dimension_numbers<[1], [0], [0], [1], [0, 0, 1, 1], [], []>} : vector<16x128xf32>, vector<128x128xf32>, vector<16x128xf32> -> vector<16x128xf32>
    %c0_40 = arith.constant 0 : index
    %c0_41 = arith.constant 0 : index
    %48 = vector.load %arg9[%c0_40, %c0_41] : memref<1x128xf32, #tpu.memory_space<vmem>>, vector<1x128xf32>
    %49 = vector.broadcast %48 : vector<1x128xf32> to vector<16x128xf32>
    %50 = arith.addf %47, %49 : vector<16x128xf32>
    %51 = arith.negf %50 : vector<16x128xf32>
    %52 = math.exp %51 : vector<16x128xf32>
    %cst_42 = arith.constant 1.000000e+00 : f32
    %53 = vector.broadcast %cst_42 : f32 to vector<16x128xf32>
    %54 = arith.addf %53, %52 : vector<16x128xf32>
    %55 = arith.divf %53, %54 : vector<16x128xf32>
    %56 = arith.mulf %50, %55 : vector<16x128xf32>
    %c1_43 = arith.constant 1 : index
    %c0_44 = arith.constant 0 : index
    %57 = vector.load %arg13[%c1_43, %c0_44] : memref<18x128xf32, #tpu.memory_space<vmem>>, vector<16x128xf32>
    tpu.vector_store %arg13[%c1_43, %c0_44], %56 {strides = array<i32>} : memref<18x128xf32, #tpu.memory_space<vmem>>, vector<16x128xf32>,
    %c0_45 = arith.constant 0 : index
    %c0_46 = arith.constant 0 : index
    %58 = vector.load %arg11[%c0_45, %c0_46] : memref<1x128xf32, #tpu.memory_space<vmem>>, vector<1x128xf32>
    %59 = vector.broadcast %58 : vector<1x128xf32> to vector<16x128xf32>
    %60 = arith.addf %45, %59 : vector<16x128xf32>
    %c0_47 = arith.constant 0 : index
    %c0_48 = arith.constant 0 : index
    %61 = vector.load %arg13[%c0_47, %c0_48] : memref<18x128xf32, #tpu.memory_space<vmem>>, vector<16x128xf32>
    %c0_49 = arith.constant 0 : index
    %c0_50 = arith.constant 0 : index
    %c0_51 = arith.constant 0 : index
    %62 = vector.load %arg10[%c0_49, %c0_50, %c0_51] : memref<3x128x128xf32, #tpu.memory_space<vmem>>, vector<1x128x128xf32>
    %63 = vector.shape_cast %62 : vector<1x128x128xf32> to vector<128x128xf32>
    %cst_52 = arith.constant dense<0.000000e+00> : vector<16x128xf32>
    %64 = tpu.matmul %61, %63, %cst_52 {dimension_numbers = #tpu.dot_dimension_numbers<[1], [0], [0], [1], [0, 0, 1, 1], [], []>} : vector<16x128xf32>, vector<128x128xf32>, vector<16x128xf32> -> vector<16x128xf32>
    %65 = arith.addf %60, %64 : vector<16x128xf32>
    %c1_53 = arith.constant 1 : index
    %c0_54 = arith.constant 0 : index
    %66 = vector.load %arg13[%c1_53, %c0_54] : memref<18x128xf32, #tpu.memory_space<vmem>>, vector<16x128xf32>
    %c1_55 = arith.constant 1 : index
    %c0_56 = arith.constant 0 : index
    %c0_57 = arith.constant 0 : index
    %67 = vector.load %arg10[%c1_55, %c0_56, %c0_57] : memref<3x128x128xf32, #tpu.memory_space<vmem>>, vector<1x128x128xf32>
    %68 = vector.shape_cast %67 : vector<1x128x128xf32> to vector<128x128xf32>
    %cst_58 = arith.constant dense<0.000000e+00> : vector<16x128xf32>
    %69 = tpu.matmul %66, %68, %cst_58 {dimension_numbers = #tpu.dot_dimension_numbers<[1], [0], [0], [1], [0, 0, 1, 1], [], []>} : vector<16x128xf32>, vector<128x128xf32>, vector<16x128xf32> -> vector<16x128xf32>
    %70 = arith.addf %65, %69 : vector<16x128xf32>
    %c2_59 = arith.constant 2 : index
    %c0_60 = arith.constant 0 : index
    %71 = vector.load %arg13[%c2_59, %c0_60] : memref<18x128xf32, #tpu.memory_space<vmem>>, vector<16x128xf32>
    %c2_61 = arith.constant 2 : index
    %c0_62 = arith.constant 0 : index
    %c0_63 = arith.constant 0 : index
    %72 = vector.load %arg10[%c2_61, %c0_62, %c0_63] : memref<3x128x128xf32, #tpu.memory_space<vmem>>, vector<1x128x128xf32>
    %73 = vector.shape_cast %72 : vector<1x128x128xf32> to vector<128x128xf32>
    %cst_64 = arith.constant dense<0.000000e+00> : vector<16x128xf32>
    %74 = tpu.matmul %71, %73, %cst_64 {dimension_numbers = #tpu.dot_dimension_numbers<[1], [0], [0], [1], [0, 0, 1, 1], [], []>} : vector<16x128xf32>, vector<128x128xf32>, vector<16x128xf32> -> vector<16x128xf32>
    %75 = arith.addf %70, %74 : vector<16x128xf32>
    %76 = arith.negf %75 : vector<16x128xf32>
    %77 = math.exp %76 : vector<16x128xf32>
    %cst_65 = arith.constant 1.000000e+00 : f32
    %78 = vector.broadcast %cst_65 : f32 to vector<16x128xf32>
    %79 = arith.addf %78, %77 : vector<16x128xf32>
    %80 = arith.divf %78, %79 : vector<16x128xf32>
    %81 = arith.mulf %75, %80 : vector<16x128xf32>
    %c0_66 = arith.constant 0 : index
    %c0_67 = arith.constant 0 : index
    %c0_68 = arith.constant 0 : index
    %82 = vector.load %arg12[%c0_66, %c0_67, %c0_68] : memref<1x16x128xf32, #tpu.memory_space<vmem>>, vector<1x16x128xf32>
    %83 = vector.shape_cast %82 : vector<1x16x128xf32> to vector<16x128xf32>
    %84 = vector.shape_cast %81 : vector<16x128xf32> to vector<1x16x128xf32>
    tpu.vector_store %arg12[%c0_66, %c0_67, %c0_68], %84 {strides = array<i32>} : memref<1x16x128xf32, #tpu.memory_space<vmem>>, vector<1x16x128xf32>,
    return
  }
  func.func @transform_0(%arg0: i32) -> (i32, i32, i32) {
    %c0_i32 = arith.constant 0 : i32
    %c0_i32_0 = arith.constant 0 : i32
    %c0_i32_1 = arith.constant 0 : i32
    return %arg0, %c0_i32, %c0_i32_0 : i32, i32, i32
  }
  func.func @transform_1(%arg0: i32) -> (i32, i32) {
    %c0_i32 = arith.constant 0 : i32
    %c0_i32_0 = arith.constant 0 : i32
    %c0_i32_1 = arith.constant 0 : i32
    return %c0_i32, %c0_i32_0 : i32, i32
  }
  func.func @transform_2(%arg0: i32) -> (i32, i32) {
    %c0_i32 = arith.constant 0 : i32
    %c0_i32_0 = arith.constant 0 : i32
    %c0_i32_1 = arith.constant 0 : i32
    return %c0_i32, %c0_i32_0 : i32, i32
  }
  func.func @transform_3(%arg0: i32) -> (i32, i32, i32) {
    %c0_i32 = arith.constant 0 : i32
    %c0_i32_0 = arith.constant 0 : i32
    %c0_i32_1 = arith.constant 0 : i32
    %c0_i32_2 = arith.constant 0 : i32
    return %c0_i32, %c0_i32_0, %c0_i32_1 : i32, i32, i32
  }
  func.func @transform_4(%arg0: i32) -> (i32, i32) {
    %c0_i32 = arith.constant 0 : i32
    %c0_i32_0 = arith.constant 0 : i32
    %c0_i32_1 = arith.constant 0 : i32
    return %c0_i32, %c0_i32_0 : i32, i32
  }
  func.func @transform_5(%arg0: i32) -> (i32, i32) {
    %c0_i32 = arith.constant 0 : i32
    %c0_i32_0 = arith.constant 0 : i32
    %c0_i32_1 = arith.constant 0 : i32
    return %c0_i32, %c0_i32_0 : i32, i32
  }
  func.func @transform_6(%arg0: i32) -> (i32, i32) {
    %c0_i32 = arith.constant 0 : i32
    %c0_i32_0 = arith.constant 0 : i32
    %c0_i32_1 = arith.constant 0 : i32
    return %c0_i32, %c0_i32_0 : i32, i32
  }
  func.func @transform_7(%arg0: i32) -> (i32, i32) {
    %c0_i32 = arith.constant 0 : i32
    %c0_i32_0 = arith.constant 0 : i32
    %c0_i32_1 = arith.constant 0 : i32
    return %c0_i32, %c0_i32_0 : i32, i32
  }
  func.func @transform_8(%arg0: i32) -> (i32, i32) {
    %c0_i32 = arith.constant 0 : i32
    %c0_i32_0 = arith.constant 0 : i32
    %c0_i32_1 = arith.constant 0 : i32
    return %c0_i32, %c0_i32_0 : i32, i32
  }
  func.func @transform_9(%arg0: i32) -> (i32, i32, i32) {
    %c0_i32 = arith.constant 0 : i32
    %c0_i32_0 = arith.constant 0 : i32
    %c0_i32_1 = arith.constant 0 : i32
    %c0_i32_2 = arith.constant 0 : i32
    return %c0_i32, %c0_i32_0, %c0_i32_1 : i32, i32, i32
  }
  func.func @transform_10(%arg0: i32) -> (i32, i32) {
    %c0_i32 = arith.constant 0 : i32
    %c0_i32_0 = arith.constant 0 : i32
    %c0_i32_1 = arith.constant 0 : i32
    return %c0_i32, %c0_i32_0 : i32, i32
  }
  func.func @transform_11(%arg0: i32) -> (i32, i32, i32) {
    %c0_i32 = arith.constant 0 : i32
    %c0_i32_0 = arith.constant 0 : i32
    %c0_i32_1 = arith.constant 0 : i32
    return %arg0, %c0_i32, %c0_i32_0 : i32, i32, i32
  }
}

</mosaic_0001>

<llo_original>
// kernel: tpu_custom_call.1
$region0: #{tpu_custom_call.1}
  #allocation0 [shape = 'u32[]', space=smem, size = 0x4, offset = 0x4, fixed_abs, tag = 'smem constant byte address 0x4 - core index']
  #allocation1 [shape = 'u32[144,128]{1,0:T(1,128)}', space=vmem, size = 0x12000, scoped, tag = 'internal scratch']
  #allocation2 [shape = 'f32[18,128]{1,0:T(8,128)}', space=vmem, size = 0x3000, scoped, tag = 'scratch operand']
  %s0 = inlined_call_operand.hbm [shape: f32[2,16,64], index: 0, kind: input, shape index: {}]
  %s1 = inlined_call_operand.hbm [shape: f32[64,128], index: 1, kind: input, shape index: {}]
  %s2 = inlined_call_operand.vmem [shape: f32[1,128], index: 2, kind: input, shape index: {}]
  %s3 = inlined_call_operand.hbm [shape: f32[3,128,128], index: 3, kind: input, shape index: {}]
  %s4 = inlined_call_operand.vmem [shape: f32[1,128], index: 4, kind: input, shape index: {}]
  %s5 = inlined_call_operand.hbm [shape: f32[64,128], index: 5, kind: input, shape index: {}]
  %s6 = inlined_call_operand.vmem [shape: f32[1,128], index: 6, kind: input, shape index: {}]
  %s7 = inlined_call_operand.hbm [shape: f32[128,128], index: 7, kind: input, shape index: {}]
  %s8 = inlined_call_operand.vmem [shape: f32[1,128], index: 8, kind: input, shape index: {}]
  %s9 = inlined_call_operand.hbm [shape: f32[3,128,128], index: 9, kind: input, shape index: {}]
  %s10 = inlined_call_operand.vmem [shape: f32[1,128], index: 10, kind: input, shape index: {}]
  %s11 = inlined_call_operand.hbm [shape: f32[2,16,128], index: 11, kind: output, shape index: {}]
  %s12 = sld [smem:[#allocation0]]
  $region101: #{tpu_custom_call.1} parent=0
    _
  %s14 = ssub.s32 1, %s12
  %s15 = scalar_select 0, %s14, %s12
  $region1: #{tpu_custom_call.1} parent=0
    #allocation3 [shape = 'u8[16384]{0}', space=vmem, size = 0x4000, scoped, tag = 'input window, operand 0']
    #allocation4 [shape = 's32[2]{0}', space=sflag, size = 0x8, scoped, tag = 'scoped memory for tpu_custom_call.1']
    #allocation5 [shape = 's32[2]{0}', space=sflag, size = 0x8, scoped, tag = 'scoped memory for tpu_custom_call.1']
    #allocation6 [shape = 'u8[32768]{0}', space=vmem, size = 0x8000, scoped, tag = 'input window, operand 1, single buffered']
    #allocation7 [shape = 's32[1]{0}', space=sflag, size = 0x4, scoped, tag = 'scoped memory for tpu_custom_call.1']
    #allocation8 [shape = 'u8[196608]{0}', space=vmem, size = 0x30000, scoped, tag = 'input window, operand 3, single buffered']
    #allocation9 [shape = 'u8[32768]{0}', space=vmem, size = 0x8000, scoped, tag = 'input window, operand 5, single buffered']
    #allocation10 [shape = 's32[1]{0}', space=sflag, size = 0x4, scoped, tag = 'scoped memory for tpu_custom_call.1']
    #allocation11 [shape = 'u8[65536]{0}', space=vmem, size = 0x10000, scoped, tag = 'input window, operand 7, single buffered']
    #allocation12 [shape = 'u8[196608]{0}', space=vmem, size = 0x30000, scoped, tag = 'input window, operand 9, single buffered']
    #allocation13 [shape = 's32[1]{0}', space=sflag, size = 0x4, scoped, tag = 'scoped memory for tpu_custom_call.1']
    #allocation14 [shape = 'u8[16384]{0}', space=vmem, size = 0x4000, scoped, tag = 'output window, operand 0']
    %16 = vsyncpa [#allocation4], 0
    %s17 = scalar_lea.sflag [#allocation4], 1
    %18 = vsyncpa %s17, 0
    %19 = vsyncpa [#allocation7], 0
    %20 = vsyncpa [#allocation10], 0
    %21 = vsyncpa [#allocation13], 0
    %22 = vsyncpa [#allocation5], 0
    %s23 = scalar_lea.sflag [#allocation5], 1
    %24 = vsyncpa %s23, 0
    loop: start=0, step=1, limit=4
    $region2: #{tpu_custom_call.1} parent=1 // loop_pre_header
      _
    $region3: #{tpu_custom_call.1} parent=1 // loop_header
      %s26 = sphi 0, %s30
      %p27 = scmp.ge.s32.totalorder %s26, 4
      %s36 = sphi 0, %s38
      %s39 = sphi 0, %s36
      %s40 = sphi 0, %s39
      %s56 = sphi 0, %s40
      %s60 = sphi 0, %s60
      %s62 = sphi 0, %s60
      %s63 = sphi 0, %s62
      %s77 = sphi 0, %s63
      %s81 = sphi 0, %s81
      %s83 = sphi 0, %s81
      %s84 = sphi 0, %s83
      %s98 = sphi 0, %s84
      %s102 = sphi 0, %s102
      %s104 = sphi 0, %s102
      %s105 = sphi 0, %s104
      %s119 = sphi 0, %s105
      %s123 = sphi 0, %s123
      %s125 = sphi 0, %s123
      %s126 = sphi 0, %s125
      %s140 = sphi 0, %s126
      %s144 = sphi 0, %s144
      %s146 = sphi 0, %s144
      %s147 = sphi 0, %s146
      %s161 = sphi 0, %s147
      %s165 = sphi 0, %s165
      %s167 = sphi 0, %s165
      %s168 = sphi 0, %s167
      %s182 = sphi 0, %s168
      %s186 = sphi 0, %s186
      %s188 = sphi 0, %s186
      %s189 = sphi 0, %s188
      %s203 = sphi 0, %s189
      %s207 = sphi 0, %s207
      %s209 = sphi 0, %s207
      %s210 = sphi 0, %s209
      %s224 = sphi 0, %s210
      %s228 = sphi 0, %s228
      %s230 = sphi 0, %s228
      %s231 = sphi 0, %s230
      %s245 = sphi 0, %s231
      %s249 = sphi 0, %s249
      %s251 = sphi 0, %s249
      %s252 = sphi 0, %s251
      %s266 = sphi 0, %s252
      %s272 = sphi 0, %s274
      %s275 = sphi 0, %s272
      %s276 = sphi 0, %s275
      %s292 = sphi 0, %s276
    $region4: #{tpu_custom_call.1} parent=1 // loop_header_branch
      %29 = sbr.rel (%p27) target = $region8
    $region5: #{tpu_custom_call.1} parent=1 // loop_body
      %s31 = ssub.s32 %s26, 1
      %s32 = ssub.s32 %s26, 2
      %s33 = sadd.s32 %s26, 1
      %s34 = ssub.s32 %s26, %s33
      %p35 = scmp.eq.s32.totalorder %s34, 0
      %s37 = sadd.s32 %s36, 1
      %s38 = scalar_select %p35, %s36, %s37
      %p41 = pneg %p35
      %p42 = scmp.eq.s32.totalorder %s26, 1
      %p43 = por %p41, %p42
      %p44 = scmp.ne.s32.totalorder %s36, %s39
      %p45 = scmp.eq.s32.totalorder %s26, 0
      %p46 = por %p44, %p45
      %p47 = scmp.ne.s32.totalorder %s36, %s39
      %p48 = scmp.eq.s32.totalorder %s31, 1
      %p49 = por %p47, %p48
      %p50 = scmp.ne.s32.totalorder %s39, %s40
      %p51 = scmp.eq.s32.totalorder %s31, 0
      %p52 = por %p50, %p51
      %p53 = scmp.ne.s32.totalorder %s39, %s40
      %p54 = scmp.eq.s32.totalorder %s32, 1
      %p55 = por %p53, %p54
      %p57 = scmp.ne.s32.totalorder %s40, %s56
      %p58 = scmp.eq.s32.totalorder %s32, 0
      %p59 = por %p57, %p58
      %s61 = sadd.s32 %s60, 1
      %p64 = scmp.eq.s32.totalorder %s26, 1
      %p65 = scmp.ne.s32.totalorder %s60, %s62
      %p66 = scmp.eq.s32.totalorder %s26, 0
      %p67 = por %p65, %p66
      %p68 = scmp.ne.s32.totalorder %s60, %s62
      %p69 = scmp.eq.s32.totalorder %s31, 1
      %p70 = por %p68, %p69
      %p71 = scmp.ne.s32.totalorder %s62, %s63
      %p72 = scmp.eq.s32.totalorder %s31, 0
      %p73 = por %p71, %p72
      %p74 = scmp.ne.s32.totalorder %s62, %s63
      %p75 = scmp.eq.s32.totalorder %s32, 1
      %p76 = por %p74, %p75
      %p78 = scmp.ne.s32.totalorder %s63, %s77
      %p79 = scmp.eq.s32.totalorder %s32, 0
      %p80 = por %p78, %p79
      %s82 = sadd.s32 %s81, 1
      %p85 = scmp.eq.s32.totalorder %s26, 1
      %p86 = scmp.ne.s32.totalorder %s81, %s83
      %p87 = scmp.eq.s32.totalorder %s26, 0
      %p88 = por %p86, %p87
      %p89 = scmp.ne.s32.totalorder %s81, %s83
      %p90 = scmp.eq.s32.totalorder %s31, 1
      %p91 = por %p89, %p90
      %p92 = scmp.ne.s32.totalorder %s83, %s84
      %p93 = scmp.eq.s32.totalorder %s31, 0
      %p94 = por %p92, %p93
      %p95 = scmp.ne.s32.totalorder %s83, %s84
      %p96 = scmp.eq.s32.totalorder %s32, 1
      %p97 = por %p95, %p96
      %p99 = scmp.ne.s32.totalorder %s84, %s98
      %p100 = scmp.eq.s32.totalorder %s32, 0
      %p101 = por %p99, %p100
      %s103 = sadd.s32 %s102, 1
      %p106 = scmp.eq.s32.totalorder %s26, 1
      %p107 = scmp.ne.s32.totalorder %s102, %s104
      %p108 = scmp.eq.s32.totalorder %s26, 0
      %p109 = por %p107, %p108
      %p110 = scmp.ne.s32.totalorder %s102, %s104
      %p111 = scmp.eq.s32.totalorder %s31, 1
      %p112 = por %p110, %p111
      %p113 = scmp.ne.s32.totalorder %s104, %s105
      %p114 = scmp.eq.s32.totalorder %s31, 0
      %p115 = por %p113, %p114
      %p116 = scmp.ne.s32.totalorder %s104, %s105
      %p117 = scmp.eq.s32.totalorder %s32, 1
      %p118 = por %p116, %p117
      %p120 = scmp.ne.s32.totalorder %s105, %s119
      %p121 = scmp.eq.s32.totalorder %s32, 0
      %p122 = por %p120, %p121
      %s124 = sadd.s32 %s123, 1
      %p127 = scmp.eq.s32.totalorder %s26, 1
      %p128 = scmp.ne.s32.totalorder %s123, %s125
      %p129 = scmp.eq.s32.totalorder %s26, 0
      %p130 = por %p128, %p129
      %p131 = scmp.ne.s32.totalorder %s123, %s125
      %p132 = scmp.eq.s32.totalorder %s31, 1
      %p133 = por %p131, %p132
      %p134 = scmp.ne.s32.totalorder %s125, %s126
      %p135 = scmp.eq.s32.totalorder %s31, 0
      %p136 = por %p134, %p135
      %p137 = scmp.ne.s32.totalorder %s125, %s126
      %p138 = scmp.eq.s32.totalorder %s32, 1
      %p139 = por %p137, %p138
      %p141 = scmp.ne.s32.totalorder %s126, %s140
      %p142 = scmp.eq.s32.totalorder %s32, 0
      %p143 = por %p141, %p142
      %s145 = sadd.s32 %s144, 1
      %p148 = scmp.eq.s32.totalorder %s26, 1
      %p149 = scmp.ne.s32.totalorder %s144, %s146
      %p150 = scmp.eq.s32.totalorder %s26, 0
      %p151 = por %p149, %p150
      %p152 = scmp.ne.s32.totalorder %s144, %s146
      %p153 = scmp.eq.s32.totalorder %s31, 1
      %p154 = por %p152, %p153
      %p155 = scmp.ne.s32.totalorder %s146, %s147
      %p156 = scmp.eq.s32.totalorder %s31, 0
      %p157 = por %p155, %p156
      %p158 = scmp.ne.s32.totalorder %s146, %s147
      %p159 = scmp.eq.s32.totalorder %s32, 1
      %p160 = por %p158, %p159
      %p162 = scmp.ne.s32.totalorder %s147, %s161
      %p163 = scmp.eq.s32.totalorder %s32, 0
      %p164 = por %p162, %p163
      %s166 = sadd.s32 %s165, 1
      %p169 = scmp.eq.s32.totalorder %s26, 1
      %p170 = scmp.ne.s32.totalorder %s165, %s167
      %p171 = scmp.eq.s32.totalorder %s26, 0
      %p172 = por %p170, %p171
      %p173 = scmp.ne.s32.totalorder %s165, %s167
      %p174 = scmp.eq.s32.totalorder %s31, 1
      %p175 = por %p173, %p174
      %p176 = scmp.ne.s32.totalorder %s167, %s168
      %p177 = scmp.eq.s32.totalorder %s31, 0
      %p178 = por %p176, %p177
      %p179 = scmp.ne.s32.totalorder %s167, %s168
      %p180 = scmp.eq.s32.totalorder %s32, 1
      %p181 = por %p179, %p180
      %p183 = scmp.ne.s32.totalorder %s168, %s182
      %p184 = scmp.eq.s32.totalorder %s32, 0
      %p185 = por %p183, %p184
      %s187 = sadd.s32 %s186, 1
      %p190 = scmp.eq.s32.totalorder %s26, 1
      %p191 = scmp.ne.s32.totalorder %s186, %s188
      %p192 = scmp.eq.s32.totalorder %s26, 0
      %p193 = por %p191, %p192
      %p194 = scmp.ne.s32.totalorder %s186, %s188
      %p195 = scmp.eq.s32.totalorder %s31, 1
      %p196 = por %p194, %p195
      %p197 = scmp.ne.s32.totalorder %s188, %s189
      %p198 = scmp.eq.s32.totalorder %s31, 0
      %p199 = por %p197, %p198
      %p200 = scmp.ne.s32.totalorder %s188, %s189
      %p201 = scmp.eq.s32.totalorder %s32, 1
      %p202 = por %p200, %p201
      %p204 = scmp.ne.s32.totalorder %s189, %s203
      %p205 = scmp.eq.s32.totalorder %s32, 0
      %p206 = por %p204, %p205
      %s208 = sadd.s32 %s207, 1
      %p211 = scmp.eq.s32.totalorder %s26, 1
      %p212 = scmp.ne.s32.totalorder %s207, %s209
      %p213 = scmp.eq.s32.totalorder %s26, 0
      %p214 = por %p212, %p213
      %p215 = scmp.ne.s32.totalorder %s207, %s209
      %p216 = scmp.eq.s32.totalorder %s31, 1
      %p217 = por %p215, %p216
      %p218 = scmp.ne.s32.totalorder %s209, %s210
      %p219 = scmp.eq.s32.totalorder %s31, 0
      %p220 = por %p218, %p219
      %p221 = scmp.ne.s32.totalorder %s209, %s210
      %p222 = scmp.eq.s32.totalorder %s32, 1
      %p223 = por %p221, %p222
      %p225 = scmp.ne.s32.totalorder %s210, %s224
      %p226 = scmp.eq.s32.totalorder %s32, 0
      %p227 = por %p225, %p226
      %s229 = sadd.s32 %s228, 1
      %p232 = scmp.eq.s32.totalorder %s26, 1
      %p233 = scmp.ne.s32.totalorder %s228, %s230
      %p234 = scmp.eq.s32.totalorder %s26, 0
      %p235 = por %p233, %p234
      %p236 = scmp.ne.s32.totalorder %s228, %s230
      %p237 = scmp.eq.s32.totalorder %s31, 1
      %p238 = por %p236, %p237
      %p239 = scmp.ne.s32.totalorder %s230, %s231
      %p240 = scmp.eq.s32.totalorder %s31, 0
      %p241 = por %p239, %p240
      %p242 = scmp.ne.s32.totalorder %s230, %s231
      %p243 = scmp.eq.s32.totalorder %s32, 1
      %p244 = por %p242, %p243
      %p246 = scmp.ne.s32.totalorder %s231, %s245
      %p247 = scmp.eq.s32.totalorder %s32, 0
      %p248 = por %p246, %p247
      %s250 = sadd.s32 %s249, 1
      %p253 = scmp.eq.s32.totalorder %s26, 1
      %p254 = scmp.ne.s32.totalorder %s249, %s251
      %p255 = scmp.eq.s32.totalorder %s26, 0
      %p256 = por %p254, %p255
      %p257 = scmp.ne.s32.totalorder %s249, %s251
      %p258 = scmp.eq.s32.totalorder %s31, 1
      %p259 = por %p257, %p258
      %p260 = scmp.ne.s32.totalorder %s251, %s252
      %p261 = scmp.eq.s32.totalorder %s31, 0
      %p262 = por %p260, %p261
      %p263 = scmp.ne.s32.totalorder %s251, %s252
      %p264 = scmp.eq.s32.totalorder %s32, 1
      %p265 = por %p263, %p264
      %p267 = scmp.ne.s32.totalorder %s252, %s266
      %p268 = scmp.eq.s32.totalorder %s32, 0
      %p269 = por %p267, %p268
      %s270 = ssub.s32 %s26, %s33
      %p271 = scmp.eq.s32.totalorder %s270, 0
      %s273 = sadd.s32 %s272, 1
      %s274 = scalar_select %p271, %s272, %s273
      %p277 = pneg %p271
      %p278 = scmp.eq.s32.totalorder %s26, 1
      %p279 = por %p277, %p278
      %p280 = scmp.ne.s32.totalorder %s272, %s275
      %p281 = scmp.eq.s32.totalorder %s26, 0
      %p282 = por %p280, %p281
      %p283 = scmp.ne.s32.totalorder %s272, %s275
      %p284 = scmp.eq.s32.totalorder %s31, 1
      %p285 = por %p283, %p284
      %p286 = scmp.ne.s32.totalorder %s275, %s276
      %p287 = scmp.eq.s32.totalorder %s31, 0
      %p288 = por %p286, %p287
      %p289 = scmp.ne.s32.totalorder %s275, %s276
      %p290 = scmp.eq.s32.totalorder %s32, 1
      %p291 = por %p289, %p290
      %p293 = scmp.ne.s32.totalorder %s276, %s292
      %p294 = scmp.eq.s32.totalorder %s32, 0
      %p295 = por %p293, %p294
      %p296 = scmp.le.s32.totalorder 1, %s26
      %p297 = scmp.lt.s32.totalorder %s26, 3
      %p298 = pnand %p296, %p297
      %p299 = pneg %p298
      // Predicated region
      $region9: #{tpu_custom_call.1} parent=5 // pred_check
        _
      $region10: #{tpu_custom_call.1} parent=5 // pred_check_branch
        %301 = sbr.rel (%p298) target = $region12
      $region11: #{tpu_custom_call.1} parent=5 // pred_region
        %s302 = ssub.s32 %s26, 1
        // Predicated region
        $region13: #{tpu_custom_call.1} parent=11 // pred_check
          %p303 = pneg %p73
        $region14: #{tpu_custom_call.1} parent=11 // pred_check_branch
          %305 = sbr.rel (%p303) target = $region16
        $region15: #{tpu_custom_call.1} parent=11 // pred_region
          %s307 = ssub.s32 1024, 1024
          %308 = vsyncadd [#allocation7], %s307
          %s309 = sshll.u32 [#allocation6], 4
          %s310 = int_to_ptr.vmem [resolvable:$true] %s309
          %315 = dma.hbm_to_vmem [thread:$0]  %s1, 1024, %s310, [#allocation7], 128, 128, 8
        $region16: #{tpu_custom_call.1} parent=11 // pred_fallthru
          _
        // Predicated region
        $region17: #{tpu_custom_call.1} parent=11 // pred_check
          %p316 = pneg %p94
        $region18: #{tpu_custom_call.1} parent=11 // pred_check_branch
          %318 = sbr.rel (%p316) target = $region20
        $region19: #{tpu_custom_call.1} parent=11 // pred_region
          _
        $region20: #{tpu_custom_call.1} parent=11 // pred_fallthru
          _
        // Predicated region
        $region21: #{tpu_custom_call.1} parent=11 // pred_check
          %p319 = pneg %p115
        $region22: #{tpu_custom_call.1} parent=11 // pred_check_branch
          %321 = sbr.rel (%p319) target = $region24
        $region23: #{tpu_custom_call.1} parent=11 // pred_region
          %s323 = ssub.s32 6144, 6144
          %324 = vsyncadd [#allocation7], %s323
          %s325 = sshll.u32 [#allocation8], 4
          %s326 = int_to_ptr.vmem [resolvable:$true] %s325
          %331 = dma.hbm_to_vmem [thread:$0]  %s3, 6144, %s326, [#allocation7], 128, 128, 8
        $region24: #{tpu_custom_call.1} parent=11 // pred_fallthru
          _
        // Predicated region
        $region25: #{tpu_custom_call.1} parent=11 // pred_check
          %p332 = pneg %p136
        $region26: #{tpu_custom_call.1} parent=11 // pred_check_branch
          %334 = sbr.rel (%p332) target = $region28
        $region27: #{tpu_custom_call.1} parent=11 // pred_region
          _
        $region28: #{tpu_custom_call.1} parent=11 // pred_fallthru
          _
        // Predicated region
        $region29: #{tpu_custom_call.1} parent=11 // pred_check
          %p335 = pneg %p157
        $region30: #{tpu_custom_call.1} parent=11 // pred_check_branch
          %337 = sbr.rel (%p335) target = $region32
        $region31: #{tpu_custom_call.1} parent=11 // pred_region
          %s339 = ssub.s32 1024, 1024
          %340 = vsyncadd [#allocation10], %s339
          %s341 = sshll.u32 [#allocation9], 4
          %s342 = int_to_ptr.vmem [resolvable:$true] %s341
          %347 = dma.hbm_to_vmem [thread:$0]  %s5, 1024, %s342, [#allocation10], 128, 128, 8
        $region32: #{tpu_custom_call.1} parent=11 // pred_fallthru
          _
        // Predicated region
        $region33: #{tpu_custom_call.1} parent=11 // pred_check
          %p348 = pneg %p178
        $region34: #{tpu_custom_call.1} parent=11 // pred_check_branch
          %350 = sbr.rel (%p348) target = $region36
        $region35: #{tpu_custom_call.1} parent=11 // pred_region
          _
        $region36: #{tpu_custom_call.1} parent=11 // pred_fallthru
          _
        // Predicated region
        $region37: #{tpu_custom_call.1} parent=11 // pred_check
          %p351 = pneg %p199
        $region38: #{tpu_custom_call.1} parent=11 // pred_check_branch
          %353 = sbr.rel (%p351) target = $region40
        $region39: #{tpu_custom_call.1} parent=11 // pred_region
          %s355 = ssub.s32 2048, 2048
          %356 = vsyncadd [#allocation10], %s355
          %s357 = sshll.u32 [#allocation11], 4
          %s358 = int_to_ptr.vmem [resolvable:$true] %s357
          %363 = dma.hbm_to_vmem [thread:$0]  %s7, 2048, %s358, [#allocation10], 128, 128, 8
        $region40: #{tpu_custom_call.1} parent=11 // pred_fallthru
          _
        // Predicated region
        $region41: #{tpu_custom_call.1} parent=11 // pred_check
          %p364 = pneg %p220
        $region42: #{tpu_custom_call.1} parent=11 // pred_check_branch
          %366 = sbr.rel (%p364) target = $region44
        $region43: #{tpu_custom_call.1} parent=11 // pred_region
          _
        $region44: #{tpu_custom_call.1} parent=11 // pred_fallthru
          _
        // Predicated region
        $region45: #{tpu_custom_call.1} parent=11 // pred_check
          %p367 = pneg %p241
        $region46: #{tpu_custom_call.1} parent=11 // pred_check_branch
          %369 = sbr.rel (%p367) target = $region48
        $region47: #{tpu_custom_call.1} parent=11 // pred_region
          %s371 = ssub.s32 6144, 6144
          %372 = vsyncadd [#allocation13], %s371
          %s373 = sshll.u32 [#allocation12], 4
          %s374 = int_to_ptr.vmem [resolvable:$true] %s373
          %379 = dma.hbm_to_vmem [thread:$0]  %s9, 6144, %s374, [#allocation13], 128, 128, 8
        $region48: #{tpu_custom_call.1} parent=11 // pred_fallthru
          _
        // Predicated region
        $region49: #{tpu_custom_call.1} parent=11 // pred_check
          %p380 = pneg %p262
        $region50: #{tpu_custom_call.1} parent=11 // pred_check_branch
          %382 = sbr.rel (%p380) target = $region52
        $region51: #{tpu_custom_call.1} parent=11 // pred_region
          _
        $region52: #{tpu_custom_call.1} parent=11 // pred_fallthru
          _
      $region12: #{tpu_custom_call.1} parent=5 // pred_fallthru
        _
      %p383 = scmp.lt.s32.totalorder %s26, 2
      // Predicated region
      $region53: #{tpu_custom_call.1} parent=5 // pred_check
        %p384 = pneg %p383
      $region54: #{tpu_custom_call.1} parent=5 // pred_check_branch
        %386 = sbr.rel (%p384) target = $region56
      $region55: #{tpu_custom_call.1} parent=5 // pred_region
        // Predicated region
        $region57: #{tpu_custom_call.1} parent=55 // pred_check
          %p387 = pneg %p46
        $region58: #{tpu_custom_call.1} parent=55 // pred_check_branch
          %389 = sbr.rel (%p387) target = $region60
        $region59: #{tpu_custom_call.1} parent=55 // pred_region
          %s390 = sand.u32 %s36, 1
          %s391 = scalar_lea.sflag [#allocation4], %s390
          %s392 = sand.u32 %s36, 1
          %s393 = smul.addr %s392, 16
          %s394 = scalar_lea.vmem [#allocation3], %s393
          %s396 = ssub.s32 256, 256
          %397 = vsyncadd %s391, %s396
          %s398 = smul.addr %s26, 2
          %s399 = smul.addr %s398, 128
          %s400 = scalar_lea.hbm %s0, %s399
          %s401 = sshll.u32 %s394, 4
          %s402 = int_to_ptr.vmem [resolvable:$true] %s401
          %407 = dma.hbm_to_vmem [thread:$0]  %s400, 256, %s402, %s391, 128, 128, 8
        $region60: #{tpu_custom_call.1} parent=55 // pred_fallthru
          _
      $region56: #{tpu_custom_call.1} parent=5 // pred_fallthru
        _
      %p408 = scmp.le.s32.totalorder 1, %s26
      %p409 = scmp.lt.s32.totalorder %s26, 3
      %p410 = pnand %p408, %p409
      %p411 = pneg %p410
      // Predicated region
      $region61: #{tpu_custom_call.1} parent=5 // pred_check
        _
      $region62: #{tpu_custom_call.1} parent=5 // pred_check_branch
        %413 = sbr.rel (%p410) target = $region64
      $region63: #{tpu_custom_call.1} parent=5 // pred_region
        %s414 = ssub.s32 %s26, 1
        %s415 = sand.u32 %s39, 1
        %s416 = scalar_lea.sflag [#allocation4], %s415
        %s417 = sand.u32 %s39, 1
        %s418 = smul.addr %s417, 16
        %s419 = scalar_lea.vmem [#allocation3], %s418
        // Predicated region
        $region65: #{tpu_custom_call.1} parent=63 // pred_check
          %p420 = pneg %p52
        $region66: #{tpu_custom_call.1} parent=63 // pred_check_branch
          %422 = sbr.rel (%p420) target = $region68
        $region67: #{tpu_custom_call.1} parent=63 // pred_region
          %423 = dma.done %s416, 256
        $region68: #{tpu_custom_call.1} parent=63 // pred_fallthru
          _
        // Predicated region
        $region69: #{tpu_custom_call.1} parent=63 // pred_check
          %p424 = pneg %p73
        $region70: #{tpu_custom_call.1} parent=63 // pred_check_branch
          %426 = sbr.rel (%p424) target = $region72
        $region71: #{tpu_custom_call.1} parent=63 // pred_region
          %427 = dma.done [#allocation7], 1024
        $region72: #{tpu_custom_call.1} parent=63 // pred_fallthru
          _
        // Predicated region
        $region73: #{tpu_custom_call.1} parent=63 // pred_check
          %p428 = pneg %p115
        $region74: #{tpu_custom_call.1} parent=63 // pred_check_branch
          %430 = sbr.rel (%p428) target = $region76
        $region75: #{tpu_custom_call.1} parent=63 // pred_region
          %431 = dma.done [#allocation7], 6144
        $region76: #{tpu_custom_call.1} parent=63 // pred_fallthru
          _
        // Predicated region
        $region77: #{tpu_custom_call.1} parent=63 // pred_check
          %p432 = pneg %p157
        $region78: #{tpu_custom_call.1} parent=63 // pred_check_branch
          %434 = sbr.rel (%p432) target = $region80
        $region79: #{tpu_custom_call.1} parent=63 // pred_region
          %435 = dma.done [#allocation10], 1024
        $region80: #{tpu_custom_call.1} parent=63 // pred_fallthru
          _
        // Predicated region
        $region81: #{tpu_custom_call.1} parent=63 // pred_check
          %p436 = pneg %p199
        $region82: #{tpu_custom_call.1} parent=63 // pred_check_branch
          %438 = sbr.rel (%p436) target = $region84
        $region83: #{tpu_custom_call.1} parent=63 // pred_region
          %439 = dma.done [#allocation10], 2048
        $region84: #{tpu_custom_call.1} parent=63 // pred_fallthru
          _
        // Predicated region
        $region85: #{tpu_custom_call.1} parent=63 // pred_check
          %p440 = pneg %p241
        $region86: #{tpu_custom_call.1} parent=63 // pred_check_branch
          %442 = sbr.rel (%p440) target = $region88
        $region87: #{tpu_custom_call.1} parent=63 // pred_region
          %443 = dma.done [#allocation13], 6144
        $region88: #{tpu_custom_call.1} parent=63 // pred_fallthru
          _
        %s444 = sand.u32 %s39, 1
        %s445 = scalar_lea.sflag [#allocation4], %s444
        %s446 = sand.u32 %s39, 1
        %s447 = smul.addr %s446, 16
        %s448 = scalar_lea.vmem [#allocation3], %s447
        %p449 = pneg %p52
        %p450 = pneg %p49
        %p451 = pneg %p73
        %p452 = pneg %p70
        %p453 = pneg %p94
        %p454 = pneg %p91
        %p455 = pneg %p115
        %p456 = pneg %p112
        %p457 = pneg %p136
        %p458 = pneg %p133
        %p459 = pneg %p157
        %p460 = pneg %p154
        %p461 = pneg %p178
        %p462 = pneg %p175
        %p463 = pneg %p199
        %p464 = pneg %p196
        %p465 = pneg %p220
        %p466 = pneg %p217
        %p467 = pneg %p241
        %p468 = pneg %p238
        %p469 = pneg %p262
        %p470 = pneg %p259
        %p471 = pneg %p288
        %p472 = pneg %p285
        %s473 = sand.u32 %s275, 1
        %s474 = scalar_lea.sflag [#allocation5], %s473
        %s475 = sand.u32 %s275, 1
        %s476 = smul.addr %s475, 16
        %s477 = scalar_lea.vmem [#allocation14], %s476
        %v478 = vld [vmem:[%s419] sm:$0xff]
        %v479 = vld [vmem:[%s419 + $0x8] sm:$0xff]
        %480 = vst [vmem:[#allocation2] sm:$0x1] 0.0
        %481 = vst [vmem:[#allocation2 + $0x11] sm:$0x1] 0.0
        %v482 = vld [vmem:[#allocation6] sm:$0xff]
        %v483 = vld [vmem:[#allocation6 + $0x8] sm:$0xff]
        %v484 = vld [vmem:[#allocation6 + $0x10] sm:$0xff]
        %v485 = vld [vmem:[#allocation6 + $0x18] sm:$0xff]
        %v486 = vld [vmem:[#allocation6 + $0x20] sm:$0xff]
        %v487 = vld [vmem:[#allocation6 + $0x28] sm:$0xff]
        %v488 = vld [vmem:[#allocation6 + $0x30] sm:$0xff]
        %v489 = vld [vmem:[#allocation6 + $0x38] sm:$0xff]
        %v490 = vld [vmem:[%s2] sm:$0x1]
        %v492 = vlaneseq
        %v493 = vshrl.u32 %v492, 7
        %v494 = vsub.s32 0, %v493
        %v495 = vrot.slane %v490, %v494
        %vm497 = vcmask 523264
        %v499 = vsel %vm497, %v478, 0
        %v502 = vsel %vm497, %v479, 0
        %504 = vmatprep.subr.mxu0 0.0
        %505 = vmatpush1.msra.mxu0 %v482
        %506 = vmatprep.subr.mxu0 0.0
        %507 = vmatpush1.msra.mxu0 %v483
        %508 = vmatprep.subr.mxu0 0.0
        %509 = vmatpush1.msra.mxu0 %v484
        %510 = vmatprep.subr.mxu0 0.0
        %511 = vmatpush1.msra.mxu0 %v485
        %512 = vmatprep.subr.mxu0 0.0
        %513 = vmatpush1.msra.mxu0 %v486
        %514 = vmatprep.subr.mxu0 0.0
        %515 = vmatpush1.msra.mxu0 %v487
        %516 = vmatprep.subr.mxu0 0.0
        %517 = vmatpush1.msra.mxu0 %v488
        %518 = vmatprep.subr.mxu0 0.0
        %519 = vmatpush1.msra.mxu0 %v489
        %520 = vmatprep.subr.mxu0 0.0
        %521 = vmatpush1.msra.mxu0 0.0
        %522 = vmatprep.subr.mxu0 0.0
        %523 = vmatpush1.msra.mxu0 0.0
        %524 = vmatprep.subr.mxu0 0.0
        %525 = vmatpush1.msra.mxu0 0.0
        %526 = vmatprep.subr.mxu0 0.0
        %527 = vmatpush1.msra.mxu0 0.0
        %528 = vmatprep.subr.mxu0 0.0
        %529 = vmatpush1.msra.mxu0 0.0
        %530 = vmatprep.subr.mxu0 0.0
        %531 = vmatpush1.msra.mxu0 0.0
        %532 = vmatprep.subr.mxu0 0.0
        %533 = vmatpush1.msra.mxu0 0.0
        %534 = vmatprep.subr.mxu0 0.0
        %535 = vmatpush1.msra.mxu0 0.0
        %536 = vmatprep.subr.mxu0 0.0
        %537 = vmatpush1.msra.mxu0 0.0
        %538 = vmatprep.subr.mxu0 0.0
        %539 = vmatpush1.msra.mxu0 0.0
        %540 = vmatprep.subr.mxu0 0.0
        %541 = vmatpush1.msra.mxu0 0.0
        %542 = vmatprep.subr.mxu0 0.0
        %543 = vmatpush1.msra.mxu0 0.0
        %544 = vmatprep.subr.mxu0 0.0
        %545 = vmatpush1.msra.mxu0 0.0
        %546 = vmatprep.subr.mxu0 0.0
        %547 = vmatpush1.msra.mxu0 0.0
        %548 = vmatprep.subr.mxu0 0.0
        %549 = vmatpush1.msra.mxu0 0.0
        %550 = vmatprep.subr.mxu0 0.0
        %551 = vmatpush1.msra.mxu0 0.0
        %552 = vmatprep.subr.mxu0 0.0
        %553 = vmatpush1.msra.mxu0 0.0
        %554 = vmatprep.subr.mxu0 0.0
        %555 = vmatpush1.msra.mxu0 0.0
        %556 = vmatprep.subr.mxu0 0.0
        %557 = vmatpush1.msra.mxu0 0.0
        %558 = vmatprep.subr.mxu0 0.0
        %559 = vmatpush1.msra.mxu0 0.0
        %560 = vmatprep.subr.mxu0 0.0
        %561 = vmatpush1.msra.mxu0 0.0
        %562 = vmatprep.subr.mxu0 0.0
        %563 = vmatpush1.msra.mxu0 0.0
        %564 = vmatprep.subr.mxu0 0.0
        %565 = vmatpush1.msra.mxu0 0.0
        %566 = vmatprep.subr.mxu0 0.0
        %567 = vmatpush1.msra.mxu0 0.0
        %568 = vmatprep.mubr.f32.mxu0 0.0
        %569 = vmatmul.mubr.f32.gmra.mrb[0].mxu0 %v499
        %v570 = vpop.f32.mrb[0].mxu0
        %v571 = vadd.f32 %v495, %v570
        %v572 = vpop.f32.mrb[0].mxu0
        %573 = vmatprep.mubr.f32.mxu0 0.0
        %574 = vmatmul.mubr.f32.gmra.mrb[0].mxu0 %v502
        %v575 = vpop.f32.mrb[0].mxu0
        %v576 = vadd.f32 %v495, %v575
        %v577 = vpop.f32.mrb[0].mxu0
        %578 = vdwg.mxu0
        %v579 = vxor.u32 %v571, 2147483648
        %v580 = vxor.u32 %v576, 2147483648
        %v581 = vmul.f32 %v579, 1.442695
        %v582 = vpow.pop %v581
        %v583 = vmul.f32 %v580, 1.442695
        %v584 = vpow.pop %v583
        %v585 = vadd.f32 %v582, 1.0
        %v586 = vadd.f32 %v584, 1.0
        %v587 = vrcp.pop %v585
        %v588 = vmul.f32 1.0, %v587
        %v589 = vrcp.pop %v586
        %v590 = vmul.f32 1.0, %v589
        %v591 = vmul.f32 %v571, %v588
        %v592 = vmul.f32 %v576, %v590
        %593 = vst [vmem:[#allocation2 + $0x1] sm:$0xff] %v591
        %594 = vst [vmem:[#allocation2 + $0x9] sm:$0xff] %v592
        %v595 = vld [vmem:[#allocation9] sm:$0xff]
        %v596 = vld [vmem:[#allocation9 + $0x8] sm:$0xff]
        %v597 = vld [vmem:[#allocation9 + $0x10] sm:$0xff]
        %v598 = vld [vmem:[#allocation9 + $0x18] sm:$0xff]
        %v599 = vld [vmem:[#allocation9 + $0x20] sm:$0xff]
        %v600 = vld [vmem:[#allocation9 + $0x28] sm:$0xff]
        %v601 = vld [vmem:[#allocation9 + $0x30] sm:$0xff]
        %v602 = vld [vmem:[#allocation9 + $0x38] sm:$0xff]
        %v603 = vld [vmem:[%s6] sm:$0x1]
        %v605 = vlaneseq
        %v606 = vshrl.u32 %v605, 7
        %v607 = vsub.s32 0, %v606
        %v608 = vrot.slane %v603, %v607
        %610 = vmatprep.subr.mxu0 0.0
        %611 = vmatpush1.msra.mxu0 %v595
        %612 = vmatprep.subr.mxu0 0.0
        %613 = vmatpush1.msra.mxu0 %v596
        %614 = vmatprep.subr.mxu0 0.0
        %615 = vmatpush1.msra.mxu0 %v597
        %616 = vmatprep.subr.mxu0 0.0
        %617 = vmatpush1.msra.mxu0 %v598
        %618 = vmatprep.subr.mxu0 0.0
        %619 = vmatpush1.msra.mxu0 %v599
        %620 = vmatprep.subr.mxu0 0.0
        %621 = vmatpush1.msra.mxu0 %v600
        %622 = vmatprep.subr.mxu0 0.0
        %623 = vmatpush1.msra.mxu0 %v601
        %624 = vmatprep.subr.mxu0 0.0
        %625 = vmatpush1.msra.mxu0 %v602
        %626 = vmatprep.subr.mxu0 0.0
        %627 = vmatpush1.msra.mxu0 0.0
        %628 = vmatprep.subr.mxu0 0.0
        %629 = vmatpush1.msra.mxu0 0.0
        %630 = vmatprep.subr.mxu0 0.0
        %631 = vmatpush1.msra.mxu0 0.0
        %632 = vmatprep.subr.mxu0 0.0
        %633 = vmatpush1.msra.mxu0 0.0
        %634 = vmatprep.subr.mxu0 0.0
        %635 = vmatpush1.msra.mxu0 0.0
        %636 = vmatprep.subr.mxu0 0.0
        %637 = vmatpush1.msra.mxu0 0.0
        %638 = vmatprep.subr.mxu0 0.0
        %639 = vmatpush1.msra.mxu0 0.0
        %640 = vmatprep.subr.mxu0 0.0
        %641 = vmatpush1.msra.mxu0 0.0
        %642 = vmatprep.subr.mxu0 0.0
        %643 = vmatpush1.msra.mxu0 0.0
        %644 = vmatprep.subr.mxu0 0.0
        %645 = vmatpush1.msra.mxu0 0.0
        %646 = vmatprep.subr.mxu0 0.0
        %647 = vmatpush1.msra.mxu0 0.0
        %648 = vmatprep.subr.mxu0 0.0
        %649 = vmatpush1.msra.mxu0 0.0
        %650 = vmatprep.subr.mxu0 0.0
        %651 = vmatpush1.msra.mxu0 0.0
        %652 = vmatprep.subr.mxu0 0.0
        %653 = vmatpush1.msra.mxu0 0.0
        %654 = vmatprep.subr.mxu0 0.0
        %655 = vmatpush1.msra.mxu0 0.0
        %656 = vmatprep.subr.mxu0 0.0
        %657 = vmatpush1.msra.mxu0 0.0
        %658 = vmatprep.subr.mxu0 0.0
        %659 = vmatpush1.msra.mxu0 0.0
        %660 = vmatprep.subr.mxu0 0.0
        %661 = vmatpush1.msra.mxu0 0.0
        %662 = vmatprep.subr.mxu0 0.0
        %663 = vmatpush1.msra.mxu0 0.0
        %664 = vmatprep.subr.mxu0 0.0
        %665 = vmatpush1.msra.mxu0 0.0
        %666 = vmatprep.subr.mxu0 0.0
        %667 = vmatpush1.msra.mxu0 0.0
        %668 = vmatprep.subr.mxu0 0.0
        %669 = vmatpush1.msra.mxu0 0.0
        %670 = vmatprep.subr.mxu0 0.0
        %671 = vmatpush1.msra.mxu0 0.0
        %672 = vmatprep.subr.mxu0 0.0
        %673 = vmatpush1.msra.mxu0 0.0
        %674 = vmatprep.mubr.f32.mxu0 0.0
        %675 = vmatmul.mubr.f32.gmra.mrb[0].mxu0 %v499
        %v676 = vpop.f32.mrb[0].mxu0
        %v677 = vadd.f32 %v608, %v676
        %v678 = vpop.f32.mrb[0].mxu0
        %679 = vmatprep.mubr.f32.mxu0 0.0
        %680 = vmatmul.mubr.f32.gmra.mrb[0].mxu0 %v502
        %v681 = vpop.f32.mrb[0].mxu0
        %v682 = vadd.f32 %v608, %v681
        %v683 = vpop.f32.mrb[0].mxu0
        %684 = vdwg.mxu0
        %v685 = vld [vmem:[%s4] sm:$0x1]
        %v687 = vlaneseq
        %v688 = vshrl.u32 %v687, 7
        %v689 = vsub.s32 0, %v688
        %v690 = vrot.slane %v685, %v689
        %v692 = vadd.f32 %v677, %v690
        %v693 = vadd.f32 %v682, %v690
        %v694 = vld [vmem:[#allocation2] sm:$0xff]
        %v695 = vld [vmem:[#allocation2 + $0x8] sm:$0xff]
        %v696 = vld [vmem:[#allocation8] sm:$0xff]
        %v697 = vld [vmem:[#allocation8 + $0x8] sm:$0xff]
        %v698 = vld [vmem:[#allocation8 + $0x10] sm:$0xff]
        %v699 = vld [vmem:[#allocation8 + $0x18] sm:$0xff]
        %v700 = vld [vmem:[#allocation8 + $0x20] sm:$0xff]
        %v701 = vld [vmem:[#allocation8 + $0x28] sm:$0xff]
        %v702 = vld [vmem:[#allocation8 + $0x30] sm:$0xff]
        %v703 = vld [vmem:[#allocation8 + $0x38] sm:$0xff]
        %v704 = vld [vmem:[#allocation8 + $0x40] sm:$0xff]
        %v705 = vld [vmem:[#allocation8 + $0x48] sm:$0xff]
        %v706 = vld [vmem:[#allocation8 + $0x50] sm:$0xff]
        %v707 = vld [vmem:[#allocation8 + $0x58] sm:$0xff]
        %v708 = vld [vmem:[#allocation8 + $0x60] sm:$0xff]
        %v709 = vld [vmem:[#allocation8 + $0x68] sm:$0xff]
        %v710 = vld [vmem:[#allocation8 + $0x70] sm:$0xff]
        %v711 = vld [vmem:[#allocation8 + $0x78] sm:$0xff]
        %712 = vmatprep.subr.mxu0 0.0
        %713 = vmatpush1.msra.mxu0 %v696
        %714 = vmatprep.subr.mxu0 0.0
        %715 = vmatpush1.msra.mxu0 %v697
        %716 = vmatprep.subr.mxu0 0.0
        %717 = vmatpush1.msra.mxu0 %v698
        %718 = vmatprep.subr.mxu0 0.0
        %719 = vmatpush1.msra.mxu0 %v699
        %720 = vmatprep.subr.mxu0 0.0
        %721 = vmatpush1.msra.mxu0 %v700
        %722 = vmatprep.subr.mxu0 0.0
        %723 = vmatpush1.msra.mxu0 %v701
        %724 = vmatprep.subr.mxu0 0.0
        %725 = vmatpush1.msra.mxu0 %v702
        %726 = vmatprep.subr.mxu0 0.0
        %727 = vmatpush1.msra.mxu0 %v703
        %728 = vmatprep.subr.mxu0 0.0
        %729 = vmatpush1.msra.mxu0 %v704
        %730 = vmatprep.subr.mxu0 0.0
        %731 = vmatpush1.msra.mxu0 %v705
        %732 = vmatprep.subr.mxu0 0.0
        %733 = vmatpush1.msra.mxu0 %v706
        %734 = vmatprep.subr.mxu0 0.0
        %735 = vmatpush1.msra.mxu0 %v707
        %736 = vmatprep.subr.mxu0 0.0
        %737 = vmatpush1.msra.mxu0 %v708
        %738 = vmatprep.subr.mxu0 0.0
        %739 = vmatpush1.msra.mxu0 %v709
        %740 = vmatprep.subr.mxu0 0.0
        %741 = vmatpush1.msra.mxu0 %v710
        %742 = vmatprep.subr.mxu0 0.0
        %743 = vmatpush1.msra.mxu0 %v711
        %744 = vmatprep.subr.mxu0 0.0
        %745 = vmatpush1.msra.mxu0 0.0
        %746 = vmatprep.subr.mxu0 0.0
        %747 = vmatpush1.msra.mxu0 0.0
        %748 = vmatprep.subr.mxu0 0.0
        %749 = vmatpush1.msra.mxu0 0.0
        %750 = vmatprep.subr.mxu0 0.0
        %751 = vmatpush1.msra.mxu0 0.0
        %752 = vmatprep.subr.mxu0 0.0
        %753 = vmatpush1.msra.mxu0 0.0
        %754 = vmatprep.subr.mxu0 0.0
        %755 = vmatpush1.msra.mxu0 0.0
        %756 = vmatprep.subr.mxu0 0.0
        %757 = vmatpush1.msra.mxu0 0.0
        %758 = vmatprep.subr.mxu0 0.0
        %759 = vmatpush1.msra.mxu0 0.0
        %760 = vmatprep.subr.mxu0 0.0
        %761 = vmatpush1.msra.mxu0 0.0
        %762 = vmatprep.subr.mxu0 0.0
        %763 = vmatpush1.msra.mxu0 0.0
        %764 = vmatprep.subr.mxu0 0.0
        %765 = vmatpush1.msra.mxu0 0.0
        %766 = vmatprep.subr.mxu0 0.0
        %767 = vmatpush1.msra.mxu0 0.0
        %768 = vmatprep.subr.mxu0 0.0
        %769 = vmatpush1.msra.mxu0 0.0
        %770 = vmatprep.subr.mxu0 0.0
        %771 = vmatpush1.msra.mxu0 0.0
        %772 = vmatprep.subr.mxu0 0.0
        %773 = vmatpush1.msra.mxu0 0.0
        %774 = vmatprep.subr.mxu0 0.0
        %775 = vmatpush1.msra.mxu0 0.0
        %776 = vmatprep.mubr.f32.mxu0 0.0
        %777 = vmatmul.mubr.f32.gmra.mrb[0].mxu0 %v694
        %v778 = vpop.f32.mrb[0].mxu0
        %v779 = vadd.f32 0.0, %v778
        %v780 = vpop.f32.mrb[0].mxu0
        %781 = vmatprep.mubr.f32.mxu0 0.0
        %782 = vmatmul.mubr.f32.gmra.mrb[0].mxu0 %v695
        %v783 = vpop.f32.mrb[0].mxu0
        %v784 = vadd.f32 0.0, %v783
        %v785 = vpop.f32.mrb[0].mxu0
        %786 = vdwg.mxu0
        %v787 = vadd.f32 %v692, %v779
        %v788 = vadd.f32 %v693, %v784
        %v789 = vld [vmem:[#allocation2 + $0x1] sm:$0xff]
        %v790 = vld [vmem:[#allocation2 + $0x9] sm:$0xff]
        %s791 = scalar_lea.vmem [#allocation8], 128
        %v792 = vld [vmem:[%s791] sm:$0xff]
        %v793 = vld [vmem:[%s791 + $0x8] sm:$0xff]
        %v794 = vld [vmem:[%s791 + $0x10] sm:$0xff]
        %v795 = vld [vmem:[%s791 + $0x18] sm:$0xff]
        %v796 = vld [vmem:[%s791 + $0x20] sm:$0xff]
        %v797 = vld [vmem:[%s791 + $0x28] sm:$0xff]
        %v798 = vld [vmem:[%s791 + $0x30] sm:$0xff]
        %v799 = vld [vmem:[%s791 + $0x38] sm:$0xff]
        %v800 = vld [vmem:[%s791 + $0x40] sm:$0xff]
        %v801 = vld [vmem:[%s791 + $0x48] sm:$0xff]
        %v802 = vld [vmem:[%s791 + $0x50] sm:$0xff]
        %v803 = vld [vmem:[%s791 + $0x58] sm:$0xff]
        %v804 = vld [vmem:[%s791 + $0x60] sm:$0xff]
        %v805 = vld [vmem:[%s791 + $0x68] sm:$0xff]
        %v806 = vld [vmem:[%s791 + $0x70] sm:$0xff]
        %v807 = vld [vmem:[%s791 + $0x78] sm:$0xff]
        %808 = vmatprep.subr.mxu0 0.0
        %809 = vmatpush1.msra.mxu0 %v792
        %810 = vmatprep.subr.mxu0 0.0
        %811 = vmatpush1.msra.mxu0 %v793
        %812 = vmatprep.subr.mxu0 0.0
        %813 = vmatpush1.msra.mxu0 %v794
        %814 = vmatprep.subr.mxu0 0.0
        %815 = vmatpush1.msra.mxu0 %v795
        %816 = vmatprep.subr.mxu0 0.0
        %817 = vmatpush1.msra.mxu0 %v796
        %818 = vmatprep.subr.mxu0 0.0
        %819 = vmatpush1.msra.mxu0 %v797
        %820 = vmatprep.subr.mxu0 0.0
        %821 = vmatpush1.msra.mxu0 %v798
        %822 = vmatprep.subr.mxu0 0.0
        %823 = vmatpush1.msra.mxu0 %v799
        %824 = vmatprep.subr.mxu0 0.0
        %825 = vmatpush1.msra.mxu0 %v800
        %826 = vmatprep.subr.mxu0 0.0
        %827 = vmatpush1.msra.mxu0 %v801
        %828 = vmatprep.subr.mxu0 0.0
        %829 = vmatpush1.msra.mxu0 %v802
        %830 = vmatprep.subr.mxu0 0.0
        %831 = vmatpush1.msra.mxu0 %v803
        %832 = vmatprep.subr.mxu0 0.0
        %833 = vmatpush1.msra.mxu0 %v804
        %834 = vmatprep.subr.mxu0 0.0
        %835 = vmatpush1.msra.mxu0 %v805
        %836 = vmatprep.subr.mxu0 0.0
        %837 = vmatpush1.msra.mxu0 %v806
        %838 = vmatprep.subr.mxu0 0.0
        %839 = vmatpush1.msra.mxu0 %v807
        %840 = vmatprep.subr.mxu0 0.0
        %841 = vmatpush1.msra.mxu0 0.0
        %842 = vmatprep.subr.mxu0 0.0
        %843 = vmatpush1.msra.mxu0 0.0
        %844 = vmatprep.subr.mxu0 0.0
        %845 = vmatpush1.msra.mxu0 0.0
        %846 = vmatprep.subr.mxu0 0.0
        %847 = vmatpush1.msra.mxu0 0.0
        %848 = vmatprep.subr.mxu0 0.0
        %849 = vmatpush1.msra.mxu0 0.0
        %850 = vmatprep.subr.mxu0 0.0
        %851 = vmatpush1.msra.mxu0 0.0
        %852 = vmatprep.subr.mxu0 0.0
        %853 = vmatpush1.msra.mxu0 0.0
        %854 = vmatprep.subr.mxu0 0.0
        %855 = vmatpush1.msra.mxu0 0.0
        %856 = vmatprep.subr.mxu0 0.0
        %857 = vmatpush1.msra.mxu0 0.0
        %858 = vmatprep.subr.mxu0 0.0
        %859 = vmatpush1.msra.mxu0 0.0
        %860 = vmatprep.subr.mxu0 0.0
        %861 = vmatpush1.msra.mxu0 0.0
        %862 = vmatprep.subr.mxu0 0.0
        %863 = vmatpush1.msra.mxu0 0.0
        %864 = vmatprep.subr.mxu0 0.0
        %865 = vmatpush1.msra.mxu0 0.0
        %866 = vmatprep.subr.mxu0 0.0
        %867 = vmatpush1.msra.mxu0 0.0
        %868 = vmatprep.subr.mxu0 0.0
        %869 = vmatpush1.msra.mxu0 0.0
        %870 = vmatprep.subr.mxu0 0.0
        %871 = vmatpush1.msra.mxu0 0.0
        %872 = vmatprep.mubr.f32.mxu0 0.0
        %873 = vmatmul.mubr.f32.gmra.mrb[0].mxu0 %v789
        %v874 = vpop.f32.mrb[0].mxu0
        %v875 = vadd.f32 0.0, %v874
        %v876 = vpop.f32.mrb[0].mxu0
        %877 = vmatprep.mubr.f32.mxu0 0.0
        %878 = vmatmul.mubr.f32.gmra.mrb[0].mxu0 %v790
        %v879 = vpop.f32.mrb[0].mxu0
        %v880 = vadd.f32 0.0, %v879
        %v881 = vpop.f32.mrb[0].mxu0
        %882 = vdwg.mxu0
        %v883 = vadd.f32 %v787, %v875
        %v884 = vadd.f32 %v788, %v880
        %v885 = vld [vmem:[#allocation2 + $0x2] sm:$0xff]
        %v886 = vld [vmem:[#allocation2 + $0xa] sm:$0xff]
        %s887 = scalar_lea.vmem [#allocation8], 256
        %v888 = vld [vmem:[%s887] sm:$0xff]
        %v889 = vld [vmem:[%s887 + $0x8] sm:$0xff]
        %v890 = vld [vmem:[%s887 + $0x10] sm:$0xff]
        %v891 = vld [vmem:[%s887 + $0x18] sm:$0xff]
        %v892 = vld [vmem:[%s887 + $0x20] sm:$0xff]
        %v893 = vld [vmem:[%s887 + $0x28] sm:$0xff]
        %v894 = vld [vmem:[%s887 + $0x30] sm:$0xff]
        %v895 = vld [vmem:[%s887 + $0x38] sm:$0xff]
        %v896 = vld [vmem:[%s887 + $0x40] sm:$0xff]
        %v897 = vld [vmem:[%s887 + $0x48] sm:$0xff]
        %v898 = vld [vmem:[%s887 + $0x50] sm:$0xff]
        %v899 = vld [vmem:[%s887 + $0x58] sm:$0xff]
        %v900 = vld [vmem:[%s887 + $0x60] sm:$0xff]
        %v901 = vld [vmem:[%s887 + $0x68] sm:$0xff]
        %v902 = vld [vmem:[%s887 + $0x70] sm:$0xff]
        %v903 = vld [vmem:[%s887 + $0x78] sm:$0xff]
        %904 = vmatprep.subr.mxu0 0.0
        %905 = vmatpush1.msra.mxu0 %v888
        %906 = vmatprep.subr.mxu0 0.0
        %907 = vmatpush1.msra.mxu0 %v889
        %908 = vmatprep.subr.mxu0 0.0
        %909 = vmatpush1.msra.mxu0 %v890
        %910 = vmatprep.subr.mxu0 0.0
        %911 = vmatpush1.msra.mxu0 %v891
        %912 = vmatprep.subr.mxu0 0.0
        %913 = vmatpush1.msra.mxu0 %v892
        %914 = vmatprep.subr.mxu0 0.0
        %915 = vmatpush1.msra.mxu0 %v893
        %916 = vmatprep.subr.mxu0 0.0
        %917 = vmatpush1.msra.mxu0 %v894
        %918 = vmatprep.subr.mxu0 0.0
        %919 = vmatpush1.msra.mxu0 %v895
        %920 = vmatprep.subr.mxu0 0.0
        %921 = vmatpush1.msra.mxu0 %v896
        %922 = vmatprep.subr.mxu0 0.0
        %923 = vmatpush1.msra.mxu0 %v897
        %924 = vmatprep.subr.mxu0 0.0
        %925 = vmatpush1.msra.mxu0 %v898
        %926 = vmatprep.subr.mxu0 0.0
        %927 = vmatpush1.msra.mxu0 %v899
        %928 = vmatprep.subr.mxu0 0.0
        %929 = vmatpush1.msra.mxu0 %v900
        %930 = vmatprep.subr.mxu0 0.0
        %931 = vmatpush1.msra.mxu0 %v901
        %932 = vmatprep.subr.mxu0 0.0
        %933 = vmatpush1.msra.mxu0 %v902
        %934 = vmatprep.subr.mxu0 0.0
        %935 = vmatpush1.msra.mxu0 %v903
        %936 = vmatprep.subr.mxu0 0.0
        %937 = vmatpush1.msra.mxu0 0.0
        %938 = vmatprep.subr.mxu0 0.0
        %939 = vmatpush1.msra.mxu0 0.0
        %940 = vmatprep.subr.mxu0 0.0
        %941 = vmatpush1.msra.mxu0 0.0
        %942 = vmatprep.subr.mxu0 0.0
        %943 = vmatpush1.msra.mxu0 0.0
        %944 = vmatprep.subr.mxu0 0.0
        %945 = vmatpush1.msra.mxu0 0.0
        %946 = vmatprep.subr.mxu0 0.0
        %947 = vmatpush1.msra.mxu0 0.0
        %948 = vmatprep.subr.mxu0 0.0
        %949 = vmatpush1.msra.mxu0 0.0
        %950 = vmatprep.subr.mxu0 0.0
        %951 = vmatpush1.msra.mxu0 0.0
        %952 = vmatprep.subr.mxu0 0.0
        %953 = vmatpush1.msra.mxu0 0.0
        %954 = vmatprep.subr.mxu0 0.0
        %955 = vmatpush1.msra.mxu0 0.0
        %956 = vmatprep.subr.mxu0 0.0
        %957 = vmatpush1.msra.mxu0 0.0
        %958 = vmatprep.subr.mxu0 0.0
        %959 = vmatpush1.msra.mxu0 0.0
        %960 = vmatprep.subr.mxu0 0.0
        %961 = vmatpush1.msra.mxu0 0.0
        %962 = vmatprep.subr.mxu0 0.0
        %963 = vmatpush1.msra.mxu0 0.0
        %964 = vmatprep.subr.mxu0 0.0
        %965 = vmatpush1.msra.mxu0 0.0
        %966 = vmatprep.subr.mxu0 0.0
        %967 = vmatpush1.msra.mxu0 0.0
        %968 = vmatprep.mubr.f32.mxu0 0.0
        %969 = vmatmul.mubr.f32.gmra.mrb[0].mxu0 %v885
        %v970 = vpop.f32.mrb[0].mxu0
        %v971 = vadd.f32 0.0, %v970
        %v972 = vpop.f32.mrb[0].mxu0
        %973 = vmatprep.mubr.f32.mxu0 0.0
        %974 = vmatmul.mubr.f32.gmra.mrb[0].mxu0 %v886
        %v975 = vpop.f32.mrb[0].mxu0
        %v976 = vadd.f32 0.0, %v975
        %v977 = vpop.f32.mrb[0].mxu0
        %978 = vdwg.mxu0
        %v979 = vadd.f32 %v883, %v971
        %v980 = vadd.f32 %v884, %v976
        %v981 = vxor.u32 %v979, 2147483648
        %v982 = vxor.u32 %v980, 2147483648
        %v983 = vmul.f32 %v981, 1.442695
        %v984 = vpow.pop %v983
        %v985 = vmul.f32 %v982, 1.442695
        %v986 = vpow.pop %v985
        %v987 = vadd.f32 %v984, 1.0
        %v988 = vadd.f32 %v986, 1.0
        %v989 = vrcp.pop %v987
        %v990 = vmul.f32 1.0, %v989
        %v991 = vrcp.pop %v988
        %v992 = vmul.f32 1.0, %v991
        %v993 = vmul.f32 %v979, %v990
        %v994 = vmul.f32 %v980, %v992
        %v995 = vld [vmem:[#allocation11] sm:$0xff]
        %v996 = vld [vmem:[#allocation11 + $0x8] sm:$0xff]
        %v997 = vld [vmem:[#allocation11 + $0x10] sm:$0xff]
        %v998 = vld [vmem:[#allocation11 + $0x18] sm:$0xff]
        %v999 = vld [vmem:[#allocation11 + $0x20] sm:$0xff]
        %v1000 = vld [vmem:[#allocation11 + $0x28] sm:$0xff]
        %v1001 = vld [vmem:[#allocation11 + $0x30] sm:$0xff]
        %v1002 = vld [vmem:[#allocation11 + $0x38] sm:$0xff]
        %v1003 = vld [vmem:[#allocation11 + $0x40] sm:$0xff]
        %v1004 = vld [vmem:[#allocation11 + $0x48] sm:$0xff]
        %v1005 = vld [vmem:[#allocation11 + $0x50] sm:$0xff]
        %v1006 = vld [vmem:[#allocation11 + $0x58] sm:$0xff]
        %v1007 = vld [vmem:[#allocation11 + $0x60] sm:$0xff]
        %v1008 = vld [vmem:[#allocation11 + $0x68] sm:$0xff]
        %v1009 = vld [vmem:[#allocation11 + $0x70] sm:$0xff]
        %v1010 = vld [vmem:[#allocation11 + $0x78] sm:$0xff]
        %v1011 = vld [vmem:[%s8] sm:$0x1]
        %v1013 = vlaneseq
        %v1014 = vshrl.u32 %v1013, 7
        %v1015 = vsub.s32 0, %v1014
        %v1016 = vrot.slane %v1011, %v1015
        %1018 = vmatprep.subr.mxu0 0.0
        %1019 = vmatpush1.msra.mxu0 %v995
        %1020 = vmatprep.subr.mxu0 0.0
        %1021 = vmatpush1.msra.mxu0 %v996
        %1022 = vmatprep.subr.mxu0 0.0
        %1023 = vmatpush1.msra.mxu0 %v997
        %1024 = vmatprep.subr.mxu0 0.0
        %1025 = vmatpush1.msra.mxu0 %v998
        %1026 = vmatprep.subr.mxu0 0.0
        %1027 = vmatpush1.msra.mxu0 %v999
        %1028 = vmatprep.subr.mxu0 0.0
        %1029 = vmatpush1.msra.mxu0 %v1000
        %1030 = vmatprep.subr.mxu0 0.0
        %1031 = vmatpush1.msra.mxu0 %v1001
        %1032 = vmatprep.subr.mxu0 0.0
        %1033 = vmatpush1.msra.mxu0 %v1002
        %1034 = vmatprep.subr.mxu0 0.0
        %1035 = vmatpush1.msra.mxu0 %v1003
        %1036 = vmatprep.subr.mxu0 0.0
        %1037 = vmatpush1.msra.mxu0 %v1004
        %1038 = vmatprep.subr.mxu0 0.0
        %1039 = vmatpush1.msra.mxu0 %v1005
        %1040 = vmatprep.subr.mxu0 0.0
        %1041 = vmatpush1.msra.mxu0 %v1006
        %1042 = vmatprep.subr.mxu0 0.0
        %1043 = vmatpush1.msra.mxu0 %v1007
        %1044 = vmatprep.subr.mxu0 0.0
        %1045 = vmatpush1.msra.mxu0 %v1008
        %1046 = vmatprep.subr.mxu0 0.0
        %1047 = vmatpush1.msra.mxu0 %v1009
        %1048 = vmatprep.subr.mxu0 0.0
        %1049 = vmatpush1.msra.mxu0 %v1010
        %1050 = vmatprep.subr.mxu0 0.0
        %1051 = vmatpush1.msra.mxu0 0.0
        %1052 = vmatprep.subr.mxu0 0.0
        %1053 = vmatpush1.msra.mxu0 0.0
        %1054 = vmatprep.subr.mxu0 0.0
        %1055 = vmatpush1.msra.mxu0 0.0
        %1056 = vmatprep.subr.mxu0 0.0
        %1057 = vmatpush1.msra.mxu0 0.0
        %1058 = vmatprep.subr.mxu0 0.0
        %1059 = vmatpush1.msra.mxu0 0.0
        %1060 = vmatprep.subr.mxu0 0.0
        %1061 = vmatpush1.msra.mxu0 0.0
        %1062 = vmatprep.subr.mxu0 0.0
        %1063 = vmatpush1.msra.mxu0 0.0
        %1064 = vmatprep.subr.mxu0 0.0
        %1065 = vmatpush1.msra.mxu0 0.0
        %1066 = vmatprep.subr.mxu0 0.0
        %1067 = vmatpush1.msra.mxu0 0.0
        %1068 = vmatprep.subr.mxu0 0.0
        %1069 = vmatpush1.msra.mxu0 0.0
        %1070 = vmatprep.subr.mxu0 0.0
        %1071 = vmatpush1.msra.mxu0 0.0
        %1072 = vmatprep.subr.mxu0 0.0
        %1073 = vmatpush1.msra.mxu0 0.0
        %1074 = vmatprep.subr.mxu0 0.0
        %1075 = vmatpush1.msra.mxu0 0.0
        %1076 = vmatprep.subr.mxu0 0.0
        %1077 = vmatpush1.msra.mxu0 0.0
        %1078 = vmatprep.subr.mxu0 0.0
        %1079 = vmatpush1.msra.mxu0 0.0
        %1080 = vmatprep.subr.mxu0 0.0
        %1081 = vmatpush1.msra.mxu0 0.0
        %1082 = vmatprep.mubr.f32.mxu0 0.0
        %1083 = vmatmul.mubr.f32.gmra.mrb[0].mxu0 %v993
        %v1084 = vpop.f32.mrb[0].mxu0
        %v1085 = vadd.f32 %v1016, %v1084
        %v1086 = vpop.f32.mrb[0].mxu0
        %1087 = vmatprep.mubr.f32.mxu0 0.0
        %1088 = vmatmul.mubr.f32.gmra.mrb[0].mxu0 %v994
        %v1089 = vpop.f32.mrb[0].mxu0
        %v1090 = vadd.f32 %v1016, %v1089
        %v1091 = vpop.f32.mrb[0].mxu0
        %1092 = vdwg.mxu0
        %v1093 = vxor.u32 %v1085, 2147483648
        %v1094 = vxor.u32 %v1090, 2147483648
        %v1095 = vmul.f32 %v1093, 1.442695
        %v1096 = vpow.pop %v1095
        %v1097 = vmul.f32 %v1094, 1.442695
        %v1098 = vpow.pop %v1097
        %v1099 = vadd.f32 %v1096, 1.0
        %v1100 = vadd.f32 %v1098, 1.0
        %v1101 = vrcp.pop %v1099
        %v1102 = vmul.f32 1.0, %v1101
        %v1103 = vrcp.pop %v1100
        %v1104 = vmul.f32 1.0, %v1103
        %v1105 = vmul.f32 %v1085, %v1102
        %v1106 = vmul.f32 %v1090, %v1104
        %1107 = vst [vmem:[#allocation2 + $0x1] sm:$0xff] %v1105
        %1108 = vst [vmem:[#allocation2 + $0x9] sm:$0xff] %v1106
        %v1109 = vld [vmem:[%s10] sm:$0x1]
        %v1111 = vlaneseq
        %v1112 = vshrl.u32 %v1111, 7
        %v1113 = vsub.s32 0, %v1112
        %v1114 = vrot.slane %v1109, %v1113
        %v1116 = vadd.f32 %v993, %v1114
        %v1117 = vadd.f32 %v994, %v1114
        %v1118 = vld [vmem:[#allocation2] sm:$0xff]
        %v1119 = vld [vmem:[#allocation2 + $0x8] sm:$0xff]
        %v1120 = vld [vmem:[#allocation12] sm:$0xff]
        %v1121 = vld [vmem:[#allocation12 + $0x8] sm:$0xff]
        %v1122 = vld [vmem:[#allocation12 + $0x10] sm:$0xff]
        %v1123 = vld [vmem:[#allocation12 + $0x18] sm:$0xff]
        %v1124 = vld [vmem:[#allocation12 + $0x20] sm:$0xff]
        %v1125 = vld [vmem:[#allocation12 + $0x28] sm:$0xff]
        %v1126 = vld [vmem:[#allocation12 + $0x30] sm:$0xff]
        %v1127 = vld [vmem:[#allocation12 + $0x38] sm:$0xff]
        %v1128 = vld [vmem:[#allocation12 + $0x40] sm:$0xff]
        %v1129 = vld [vmem:[#allocation12 + $0x48] sm:$0xff]
        %v1130 = vld [vmem:[#allocation12 + $0x50] sm:$0xff]
        %v1131 = vld [vmem:[#allocation12 + $0x58] sm:$0xff]
        %v1132 = vld [vmem:[#allocation12 + $0x60] sm:$0xff]
        %v1133 = vld [vmem:[#allocation12 + $0x68] sm:$0xff]
        %v1134 = vld [vmem:[#allocation12 + $0x70] sm:$0xff]
        %v1135 = vld [vmem:[#allocation12 + $0x78] sm:$0xff]
        %1136 = vmatprep.subr.mxu0 0.0
        %1137 = vmatpush1.msra.mxu0 %v1120
        %1138 = vmatprep.subr.mxu0 0.0
        %1139 = vmatpush1.msra.mxu0 %v1121
        %1140 = vmatprep.subr.mxu0 0.0
        %1141 = vmatpush1.msra.mxu0 %v1122
        %1142 = vmatprep.subr.mxu0 0.0
        %1143 = vmatpush1.msra.mxu0 %v1123
        %1144 = vmatprep.subr.mxu0 0.0
        %1145 = vmatpush1.msra.mxu0 %v1124
        %1146 = vmatprep.subr.mxu0 0.0
        %1147 = vmatpush1.msra.mxu0 %v1125
        %1148 = vmatprep.subr.mxu0 0.0
        %1149 = vmatpush1.msra.mxu0 %v1126
        %1150 = vmatprep.subr.mxu0 0.0
        %1151 = vmatpush1.msra.mxu0 %v1127
        %1152 = vmatprep.subr.mxu0 0.0
        %1153 = vmatpush1.msra.mxu0 %v1128
        %1154 = vmatprep.subr.mxu0 0.0
        %1155 = vmatpush1.msra.mxu0 %v1129
        %1156 = vmatprep.subr.mxu0 0.0
        %1157 = vmatpush1.msra.mxu0 %v1130
        %1158 = vmatprep.subr.mxu0 0.0
        %1159 = vmatpush1.msra.mxu0 %v1131
        %1160 = vmatprep.subr.mxu0 0.0
        %1161 = vmatpush1.msra.mxu0 %v1132
        %1162 = vmatprep.subr.mxu0 0.0
        %1163 = vmatpush1.msra.mxu0 %v1133
        %1164 = vmatprep.subr.mxu0 0.0
        %1165 = vmatpush1.msra.mxu0 %v1134
        %1166 = vmatprep.subr.mxu0 0.0
        %1167 = vmatpush1.msra.mxu0 %v1135
        %1168 = vmatprep.subr.mxu0 0.0
        %1169 = vmatpush1.msra.mxu0 0.0
        %1170 = vmatprep.subr.mxu0 0.0
        %1171 = vmatpush1.msra.mxu0 0.0
        %1172 = vmatprep.subr.mxu0 0.0
        %1173 = vmatpush1.msra.mxu0 0.0
        %1174 = vmatprep.subr.mxu0 0.0
        %1175 = vmatpush1.msra.mxu0 0.0
        %1176 = vmatprep.subr.mxu0 0.0
        %1177 = vmatpush1.msra.mxu0 0.0
        %1178 = vmatprep.subr.mxu0 0.0
        %1179 = vmatpush1.msra.mxu0 0.0
        %1180 = vmatprep.subr.mxu0 0.0
        %1181 = vmatpush1.msra.mxu0 0.0
        %1182 = vmatprep.subr.mxu0 0.0
        %1183 = vmatpush1.msra.mxu0 0.0
        %1184 = vmatprep.subr.mxu0 0.0
        %1185 = vmatpush1.msra.mxu0 0.0
        %1186 = vmatprep.subr.mxu0 0.0
        %1187 = vmatpush1.msra.mxu0 0.0
        %1188 = vmatprep.subr.mxu0 0.0
        %1189 = vmatpush1.msra.mxu0 0.0
        %1190 = vmatprep.subr.mxu0 0.0
        %1191 = vmatpush1.msra.mxu0 0.0
        %1192 = vmatprep.subr.mxu0 0.0
        %1193 = vmatpush1.msra.mxu0 0.0
        %1194 = vmatprep.subr.mxu0 0.0
        %1195 = vmatpush1.msra.mxu0 0.0
        %1196 = vmatprep.subr.mxu0 0.0
        %1197 = vmatpush1.msra.mxu0 0.0
        %1198 = vmatprep.subr.mxu0 0.0
        %1199 = vmatpush1.msra.mxu0 0.0
        %1200 = vmatprep.mubr.f32.mxu0 0.0
        %1201 = vmatmul.mubr.f32.gmra.mrb[0].mxu0 %v1118
        %v1202 = vpop.f32.mrb[0].mxu0
        %v1203 = vadd.f32 0.0, %v1202
        %v1204 = vpop.f32.mrb[0].mxu0
        %1205 = vmatprep.mubr.f32.mxu0 0.0
        %1206 = vmatmul.mubr.f32.gmra.mrb[0].mxu0 %v1119
        %v1207 = vpop.f32.mrb[0].mxu0
        %v1208 = vadd.f32 0.0, %v1207
        %v1209 = vpop.f32.mrb[0].mxu0
        %1210 = vdwg.mxu0
        %v1211 = vadd.f32 %v1116, %v1203
        %v1212 = vadd.f32 %v1117, %v1208
        %v1213 = vld [vmem:[#allocation2 + $0x1] sm:$0xff]
        %v1214 = vld [vmem:[#allocation2 + $0x9] sm:$0xff]
        %s1215 = scalar_lea.vmem [#allocation12], 128
        %v1216 = vld [vmem:[%s1215] sm:$0xff]
        %v1217 = vld [vmem:[%s1215 + $0x8] sm:$0xff]
        %v1218 = vld [vmem:[%s1215 + $0x10] sm:$0xff]
        %v1219 = vld [vmem:[%s1215 + $0x18] sm:$0xff]
        %v1220 = vld [vmem:[%s1215 + $0x20] sm:$0xff]
        %v1221 = vld [vmem:[%s1215 + $0x28] sm:$0xff]
        %v1222 = vld [vmem:[%s1215 + $0x30] sm:$0xff]
        %v1223 = vld [vmem:[%s1215 + $0x38] sm:$0xff]
        %v1224 = vld [vmem:[%s1215 + $0x40] sm:$0xff]
        %v1225 = vld [vmem:[%s1215 + $0x48] sm:$0xff]
        %v1226 = vld [vmem:[%s1215 + $0x50] sm:$0xff]
        %v1227 = vld [vmem:[%s1215 + $0x58] sm:$0xff]
        %v1228 = vld [vmem:[%s1215 + $0x60] sm:$0xff]
        %v1229 = vld [vmem:[%s1215 + $0x68] sm:$0xff]
        %v1230 = vld [vmem:[%s1215 + $0x70] sm:$0xff]
        %v1231 = vld [vmem:[%s1215 + $0x78] sm:$0xff]
        %1232 = vmatprep.subr.mxu0 0.0
        %1233 = vmatpush1.msra.mxu0 %v1216
        %1234 = vmatprep.subr.mxu0 0.0
        %1235 = vmatpush1.msra.mxu0 %v1217
        %1236 = vmatprep.subr.mxu0 0.0
        %1237 = vmatpush1.msra.mxu0 %v1218
        %1238 = vmatprep.subr.mxu0 0.0
        %1239 = vmatpush1.msra.mxu0 %v1219
        %1240 = vmatprep.subr.mxu0 0.0
        %1241 = vmatpush1.msra.mxu0 %v1220
        %1242 = vmatprep.subr.mxu0 0.0
        %1243 = vmatpush1.msra.mxu0 %v1221
        %1244 = vmatprep.subr.mxu0 0.0
        %1245 = vmatpush1.msra.mxu0 %v1222
        %1246 = vmatprep.subr.mxu0 0.0
        %1247 = vmatpush1.msra.mxu0 %v1223
        %1248 = vmatprep.subr.mxu0 0.0
        %1249 = vmatpush1.msra.mxu0 %v1224
        %1250 = vmatprep.subr.mxu0 0.0
        %1251 = vmatpush1.msra.mxu0 %v1225
        %1252 = vmatprep.subr.mxu0 0.0
        %1253 = vmatpush1.msra.mxu0 %v1226
        %1254 = vmatprep.subr.mxu0 0.0
        %1255 = vmatpush1.msra.mxu0 %v1227
        %1256 = vmatprep.subr.mxu0 0.0
        %1257 = vmatpush1.msra.mxu0 %v1228
        %1258 = vmatprep.subr.mxu0 0.0
        %1259 = vmatpush1.msra.mxu0 %v1229
        %1260 = vmatprep.subr.mxu0 0.0
        %1261 = vmatpush1.msra.mxu0 %v1230
        %1262 = vmatprep.subr.mxu0 0.0
        %1263 = vmatpush1.msra.mxu0 %v1231
        %1264 = vmatprep.subr.mxu0 0.0
        %1265 = vmatpush1.msra.mxu0 0.0
        %1266 = vmatprep.subr.mxu0 0.0
        %1267 = vmatpush1.msra.mxu0 0.0
        %1268 = vmatprep.subr.mxu0 0.0
        %1269 = vmatpush1.msra.mxu0 0.0
        %1270 = vmatprep.subr.mxu0 0.0
        %1271 = vmatpush1.msra.mxu0 0.0
        %1272 = vmatprep.subr.mxu0 0.0
        %1273 = vmatpush1.msra.mxu0 0.0
        %1274 = vmatprep.subr.mxu0 0.0
        %1275 = vmatpush1.msra.mxu0 0.0
        %1276 = vmatprep.subr.mxu0 0.0
        %1277 = vmatpush1.msra.mxu0 0.0
        %1278 = vmatprep.subr.mxu0 0.0
        %1279 = vmatpush1.msra.mxu0 0.0
        %1280 = vmatprep.subr.mxu0 0.0
        %1281 = vmatpush1.msra.mxu0 0.0
        %1282 = vmatprep.subr.mxu0 0.0
        %1283 = vmatpush1.msra.mxu0 0.0
        %1284 = vmatprep.subr.mxu0 0.0
        %1285 = vmatpush1.msra.mxu0 0.0
        %1286 = vmatprep.subr.mxu0 0.0
        %1287 = vmatpush1.msra.mxu0 0.0
        %1288 = vmatprep.subr.mxu0 0.0
        %1289 = vmatpush1.msra.mxu0 0.0
        %1290 = vmatprep.subr.mxu0 0.0
        %1291 = vmatpush1.msra.mxu0 0.0
        %1292 = vmatprep.subr.mxu0 0.0
        %1293 = vmatpush1.msra.mxu0 0.0
        %1294 = vmatprep.subr.mxu0 0.0
        %1295 = vmatpush1.msra.mxu0 0.0
        %1296 = vmatprep.mubr.f32.mxu0 0.0
        %1297 = vmatmul.mubr.f32.gmra.mrb[0].mxu0 %v1213
        %v1298 = vpop.f32.mrb[0].mxu0
        %v1299 = vadd.f32 0.0, %v1298
        %v1300 = vpop.f32.mrb[0].mxu0
        %1301 = vmatprep.mubr.f32.mxu0 0.0
        %1302 = vmatmul.mubr.f32.gmra.mrb[0].mxu0 %v1214
        %v1303 = vpop.f32.mrb[0].mxu0
        %v1304 = vadd.f32 0.0, %v1303
        %v1305 = vpop.f32.mrb[0].mxu0
        %1306 = vdwg.mxu0
        %v1307 = vadd.f32 %v1211, %v1299
        %v1308 = vadd.f32 %v1212, %v1304
        %v1309 = vld [vmem:[#allocation2 + $0x2] sm:$0xff]
        %v1310 = vld [vmem:[#allocation2 + $0xa] sm:$0xff]
        %s1311 = scalar_lea.vmem [#allocation12], 256
        %v1312 = vld [vmem:[%s1311] sm:$0xff]
        %v1313 = vld [vmem:[%s1311 + $0x8] sm:$0xff]
        %v1314 = vld [vmem:[%s1311 + $0x10] sm:$0xff]
        %v1315 = vld [vmem:[%s1311 + $0x18] sm:$0xff]
        %v1316 = vld [vmem:[%s1311 + $0x20] sm:$0xff]
        %v1317 = vld [vmem:[%s1311 + $0x28] sm:$0xff]
        %v1318 = vld [vmem:[%s1311 + $0x30] sm:$0xff]
        %v1319 = vld [vmem:[%s1311 + $0x38] sm:$0xff]
        %v1320 = vld [vmem:[%s1311 + $0x40] sm:$0xff]
        %v1321 = vld [vmem:[%s1311 + $0x48] sm:$0xff]
        %v1322 = vld [vmem:[%s1311 + $0x50] sm:$0xff]
        %v1323 = vld [vmem:[%s1311 + $0x58] sm:$0xff]
        %v1324 = vld [vmem:[%s1311 + $0x60] sm:$0xff]
        %v1325 = vld [vmem:[%s1311 + $0x68] sm:$0xff]
        %v1326 = vld [vmem:[%s1311 + $0x70] sm:$0xff]
        %v1327 = vld [vmem:[%s1311 + $0x78] sm:$0xff]
        %1328 = vmatprep.subr.mxu0 0.0
        %1329 = vmatpush1.msra.mxu0 %v1312
        %1330 = vmatprep.subr.mxu0 0.0
        %1331 = vmatpush1.msra.mxu0 %v1313
        %1332 = vmatprep.subr.mxu0 0.0
        %1333 = vmatpush1.msra.mxu0 %v1314
        %1334 = vmatprep.subr.mxu0 0.0
        %1335 = vmatpush1.msra.mxu0 %v1315
        %1336 = vmatprep.subr.mxu0 0.0
        %1337 = vmatpush1.msra.mxu0 %v1316
        %1338 = vmatprep.subr.mxu0 0.0
        %1339 = vmatpush1.msra.mxu0 %v1317
        %1340 = vmatprep.subr.mxu0 0.0
        %1341 = vmatpush1.msra.mxu0 %v1318
        %1342 = vmatprep.subr.mxu0 0.0
        %1343 = vmatpush1.msra.mxu0 %v1319
        %1344 = vmatprep.subr.mxu0 0.0
        %1345 = vmatpush1.msra.mxu0 %v1320
        %1346 = vmatprep.subr.mxu0 0.0
        %1347 = vmatpush1.msra.mxu0 %v1321
        %1348 = vmatprep.subr.mxu0 0.0
        %1349 = vmatpush1.msra.mxu0 %v1322
        %1350 = vmatprep.subr.mxu0 0.0
        %1351 = vmatpush1.msra.mxu0 %v1323
        %1352 = vmatprep.subr.mxu0 0.0
        %1353 = vmatpush1.msra.mxu0 %v1324
        %1354 = vmatprep.subr.mxu0 0.0
        %1355 = vmatpush1.msra.mxu0 %v1325
        %1356 = vmatprep.subr.mxu0 0.0
        %1357 = vmatpush1.msra.mxu0 %v1326
        %1358 = vmatprep.subr.mxu0 0.0
        %1359 = vmatpush1.msra.mxu0 %v1327
        %1360 = vmatprep.subr.mxu0 0.0
        %1361 = vmatpush1.msra.mxu0 0.0
        %1362 = vmatprep.subr.mxu0 0.0
        %1363 = vmatpush1.msra.mxu0 0.0
        %1364 = vmatprep.subr.mxu0 0.0
        %1365 = vmatpush1.msra.mxu0 0.0
        %1366 = vmatprep.subr.mxu0 0.0
        %1367 = vmatpush1.msra.mxu0 0.0
        %1368 = vmatprep.subr.mxu0 0.0
        %1369 = vmatpush1.msra.mxu0 0.0
        %1370 = vmatprep.subr.mxu0 0.0
        %1371 = vmatpush1.msra.mxu0 0.0
        %1372 = vmatprep.subr.mxu0 0.0
        %1373 = vmatpush1.msra.mxu0 0.0
        %1374 = vmatprep.subr.mxu0 0.0
        %1375 = vmatpush1.msra.mxu0 0.0
        %1376 = vmatprep.subr.mxu0 0.0
        %1377 = vmatpush1.msra.mxu0 0.0
        %1378 = vmatprep.subr.mxu0 0.0
        %1379 = vmatpush1.msra.mxu0 0.0
        %1380 = vmatprep.subr.mxu0 0.0
        %1381 = vmatpush1.msra.mxu0 0.0
        %1382 = vmatprep.subr.mxu0 0.0
        %1383 = vmatpush1.msra.mxu0 0.0
        %1384 = vmatprep.subr.mxu0 0.0
        %1385 = vmatpush1.msra.mxu0 0.0
        %1386 = vmatprep.subr.mxu0 0.0
        %1387 = vmatpush1.msra.mxu0 0.0
        %1388 = vmatprep.subr.mxu0 0.0
        %1389 = vmatpush1.msra.mxu0 0.0
        %1390 = vmatprep.subr.mxu0 0.0
        %1391 = vmatpush1.msra.mxu0 0.0
        %1392 = vmatprep.mubr.f32.mxu0 0.0
        %1393 = vmatmul.mubr.f32.gmra.mrb[0].mxu0 %v1309
        %v1394 = vpop.f32.mrb[0].mxu0
        %v1395 = vadd.f32 0.0, %v1394
        %v1396 = vpop.f32.mrb[0].mxu0
        %1397 = vmatprep.mubr.f32.mxu0 0.0
        %1398 = vmatmul.mubr.f32.gmra.mrb[0].mxu0 %v1310
        %v1399 = vpop.f32.mrb[0].mxu0
        %v1400 = vadd.f32 0.0, %v1399
        %v1401 = vpop.f32.mrb[0].mxu0
        %1402 = vdwg.mxu0
        %v1403 = vadd.f32 %v1307, %v1395
        %v1404 = vadd.f32 %v1308, %v1400
        %v1405 = vxor.u32 %v1403, 2147483648
        %v1406 = vxor.u32 %v1404, 2147483648
        %v1407 = vmul.f32 %v1405, 1.442695
        %v1408 = vpow.pop %v1407
        %v1409 = vmul.f32 %v1406, 1.442695
        %v1410 = vpow.pop %v1409
        %v1411 = vadd.f32 %v1408, 1.0
        %v1412 = vadd.f32 %v1410, 1.0
        %v1413 = vrcp.pop %v1411
        %v1414 = vmul.f32 1.0, %v1413
        %v1415 = vrcp.pop %v1412
        %v1416 = vmul.f32 1.0, %v1415
        %v1417 = vmul.f32 %v1403, %v1414
        %v1418 = vmul.f32 %v1404, %v1416
        %1419 = vst [vmem:[%s477] sm:$0xff] %v1417
        %1420 = vst [vmem:[%s477 + $0x8] sm:$0xff] %v1418
        %s1421 = sand.u32 %s275, 1
        %s1422 = scalar_lea.sflag [#allocation5], %s1421
        %s1423 = sand.u32 %s275, 1
        %s1424 = smul.addr %s1423, 16
        %s1425 = scalar_lea.vmem [#allocation14], %s1424
        // Predicated region
        $region89: #{tpu_custom_call.1} parent=63 // pred_check
          %p1426 = pneg %p285
        $region90: #{tpu_custom_call.1} parent=63 // pred_check_branch
          %1428 = sbr.rel (%p1426) target = $region92
        $region91: #{tpu_custom_call.1} parent=63 // pred_region
          %s1430 = ssub.s32 256, 256
          %1431 = vsyncadd %s1422, %s1430
          %s1432 = smul.addr %s31, 2
          %s1433 = smul.addr %s1432, 128
          %s1434 = scalar_lea.hbm %s11, %s1433
          %s1435 = sshll.u32 %s1425, 4
          %s1436 = int_to_ptr.vmem [resolvable:$true] %s1435
          %1441 = dma.vmem_to_hbm [thread:$0]  %s1436, 256, %s1434, %s1422, 128, 128, 8
        $region92: #{tpu_custom_call.1} parent=63 // pred_fallthru
          _
      $region64: #{tpu_custom_call.1} parent=5 // pred_fallthru
        _
      %p1442 = scmp.le.s32.totalorder 2, %s26
      // Predicated region
      $region93: #{tpu_custom_call.1} parent=5 // pred_check
        %p1443 = pneg %p1442
      $region94: #{tpu_custom_call.1} parent=5 // pred_check_branch
        %1445 = sbr.rel (%p1443) target = $region96
      $region95: #{tpu_custom_call.1} parent=5 // pred_region
        %s1446 = ssub.s32 %s26, 2
        // Predicated region
        $region97: #{tpu_custom_call.1} parent=95 // pred_check
          %p1447 = pneg %p291
        $region98: #{tpu_custom_call.1} parent=95 // pred_check_branch
          %1449 = sbr.rel (%p1447) target = $region100
        $region99: #{tpu_custom_call.1} parent=95 // pred_region
          %s1450 = sand.u32 %s276, 1
          %s1451 = scalar_lea.sflag [#allocation5], %s1450
          %s1452 = sand.u32 %s276, 1
          %s1453 = smul.addr %s1452, 16
          %s1454 = scalar_lea.vmem [#allocation14], %s1453
          %1455 = dma.done %s1451, 256
        $region100: #{tpu_custom_call.1} parent=95 // pred_fallthru
          _
      $region96: #{tpu_custom_call.1} parent=5 // pred_fallthru
        _
    $region6: #{tpu_custom_call.1} parent=1 // loop_footer
      %s30 = sadd.s32 1, %s26
    $region7: #{tpu_custom_call.1} parent=1 // loop_footer_branch
      %25 = sbr.rel target = $region3
    $region8: #{tpu_custom_call.1} parent=1 // loop_exit
      _
    %1456 = vsyncpa [#allocation4], 1
    %s1457 = scalar_lea.sflag [#allocation4], 1
    %1458 = vsyncpa %s1457, 1
    %1459 = vsyncpa [#allocation7], 1
    %1460 = vsyncpa [#allocation10], 1
    %1461 = vsyncpa [#allocation13], 1
    %1462 = vsyncpa [#allocation5], 1
    %s1463 = scalar_lea.sflag [#allocation5], 1
    %1464 = vsyncpa %s1463, 1

</llo_original>
